<compile_context>
chip_gen: v6e
topology: v6e:2x2x1
jax: 0.10.0
libtpu: 0.0.40
codegen_flags: <defaults>
</compile_context>

<pallas_src>
import functools

import jax
import jax.numpy as jnp
from jax.experimental import pallas as pl
from jax.experimental.pallas import tpu as pltpu

BN_EPS = 1e-5
LN_EPS = 1e-5
PPAD = 128   # palette head padded to 128 output lanes


def _round_up(n, m):
    return ((n + m - 1) // m) * m


def _bias_layout(hidden_size, visual_feature_dim):
    """Lane offsets for the single packed bias operand (every slot 128-aligned)."""
    half = hidden_size // 2
    order = [
        ("cb1", 64), ("cb2", 128), ("cb3", PPAD),
        ("tb1", 256), ("tb2", 512), ("tb3", half),
        ("lb1", 256), ("lb2", 512), ("lb3", half),
        ("fb", visual_feature_dim), ("lng", visual_feature_dim),
        ("lnb", visual_feature_dim),
    ]
    offs, sizes, off = {}, {}, 0
    for name, n in order:
        offs[name] = off
        sizes[name] = n
        off += _round_up(n, 128)
    total = _round_up(off, 128)
    return offs, sizes, total


def _dot(x_f32, w_ref):
    """bf16 x bf16 MXU matmul with f32 accumulation (weights stored bf16)."""
    return jnp.dot(x_f32.astype(jnp.bfloat16), w_ref[...],
                   preferred_element_type=jnp.float32)


def _make_kernel(batch_tile, num_colors, offs, sizes):
    nc = num_colors

    def kernel(colors_ref, typo_ref, layout_ref,
               cw1_ref, cw2_ref, cw3_ref,
               tw1_ref, tw2_ref, tw3_ref,
               lw1_ref, lw2_ref, lw3_ref,
               fw_ref, bias_ref, out_ref):
        def b(name):
            o = offs[name]
            return bias_ref[:, o:o + sizes[name]]     # static 128-aligned slice

        # ---- color encoder on the flattened palette tile (bt*NC, 3) ----
        x = colors_ref[...]
        # Linear(3,64) on the VPU: three broadcast FMAs (avoid a K=3 MXU pass)
        h = (x[:, 0:1] * cw1_ref[0:1, :]
             + x[:, 1:2] * cw1_ref[1:2, :]
             + x[:, 2:3] * cw1_ref[2:3, :]
             + b("cb1"))
        h = jnp.maximum(h, 0.0)
        # eval-mode BatchNorm folded into cw2/cb2 on the host
        h = jnp.maximum(_dot(h, cw2_ref) + b("cb2"), 0.0)             # (bt*NC,128)
        ce = _dot(h, cw3_ref) + b("cb3")                              # (bt*NC,PPAD)
        # mean over the NC colors of each image: sublane reduction (no pool matmul)
        cs = jnp.mean(ce.reshape(batch_tile, nc, PPAD), axis=1)       # (bt, PPAD)

        # ---- typography encoder (Dropout = identity in eval) ----
        t = typo_ref[...]
        t = jnp.maximum(_dot(t, tw1_ref) + b("tb1"), 0.0)
        t = jnp.maximum(_dot(t, tw2_ref) + b("tb2"), 0.0)
        te = _dot(t, tw3_ref) + b("tb3")                              # (bt, H/2)

        # ---- layout encoder ----
        l = layout_ref[...]
        l = jnp.maximum(_dot(l, lw1_ref) + b("lb1"), 0.0)
        l = jnp.maximum(_dot(l, lw2_ref) + b("lb2"), 0.0)
        le = _dot(l, lw3_ref) + b("lb3")                              # (bt, H/2)

        # ---- visual fusion: ONE K = PPAD + hidden MXU pass ----
        xf = jnp.concatenate([cs, te, le], axis=-1)                   # (bt, PPAD+H)
        fused = _dot(xf, fw_ref) + b("fb")                            # (bt, V)
        mu = jnp.mean(fused, axis=-1, keepdims=True)
        var = jnp.mean(jnp.square(fused - mu), axis=-1, keepdims=True)
        vf = jnp.maximum((fused - mu) * jax.lax.rsqrt(var + LN_EPS)
                         * b("lng") + b("lnb"), 0.0)

        # single lane-dense store: [V | 128 | H/2 | H/2]
        out_ref[...] = jnp.concatenate([vf, cs, te, le], axis=-1)

    return kernel


def fold_params(p, *, palette_size, hidden_size, visual_feature_dim):
    """Host-side folding: BN->cw2/cb2, palette-head padding to 128 lanes,
    fusion-weight merge (K = 128 + hidden), bias packing, bf16 weight casts."""
    f32, bf16 = jnp.float32, jnp.bfloat16
    P, V = palette_size, visual_feature_dim

    # fold eval BatchNorm affine into the following Linear(64,128)
    inv = jax.lax.rsqrt(p["bnv"].astype(f32) + BN_EPS)                 # (1,64)
    scale = p["bng"] * inv                                             # (1,64)
    shift = p["bnb"] - p["bnm"] * scale                                # (1,64)
    cw2_f = p["cw2"] * scale.reshape(-1, 1)                            # (64,128)
    cb2_f = p["cb2"] + shift @ p["cw2"]                                # (1,128)

    # pad palette head (128 -> P) to 128 output lanes with zero weights
    cw3_p = jnp.zeros((128, PPAD), f32).at[:, :P].set(p["cw3"])
    cb3_p = jnp.zeros((1, PPAD), f32).at[:, :P].set(p["cb3"])

    # merge fusion weight: rows follow the in-kernel concat [cs_pad | te | le];
    # padded cs columns are exactly zero, so the zero rows P:PPAD are inert
    fw = p["fw"]                                                       # (P+H, V)
    fw_m = jnp.zeros((PPAD + hidden_size, V), f32)
    fw_m = fw_m.at[:P, :].set(fw[:P])
    fw_m = fw_m.at[PPAD:, :].set(fw[P:P + hidden_size])

    # pack every bias / LN vector into one lane-dense (1, total) f32 operand
    offs, _sizes, total = _bias_layout(hidden_size, visual_feature_dim)
    vecs = {"cb1": p["cb1"], "cb2": cb2_f, "cb3": cb3_p,
            "tb1": p["tb1"], "tb2": p["tb2"], "tb3": p["tb3"],
            "lb1": p["lb1"], "lb2": p["lb2"], "lb3": p["lb3"],
            "fb": p["fb"], "lng": p["lng"], "lnb": p["lnb"]}
    bias = jnp.zeros((1, total), f32)
    for name, v in vecs.items():
        v = v.astype(f32).reshape(1, -1)
        bias = bias.at[:, offs[name]:offs[name] + v.shape[-1]].set(v)

    return {
        "cw1": p["cw1"].astype(f32),
        "cw2": cw2_f.astype(bf16),
        "cw3": cw3_p.astype(bf16),
        "tw1": p["tw1"].astype(bf16), "tw2": p["tw2"].astype(bf16),
        "tw3": p["tw3"].astype(bf16),
        "lw1": p["lw1"].astype(bf16), "lw2": p["lw2"].astype(bf16),
        "lw3": p["lw3"].astype(bf16),
        "fw": fw_m.astype(bf16),
        "bias": bias,
    }


def _pick_batch_tile(batch):
    """Single tile for small B; at large B tile in multiples of 8 for (8,128)."""
    if batch <= 256:
        return batch
    for t in (256, 128, 64, 32, 16, 8):
        if batch % t == 0:
            return t
    return batch


@functools.partial(jax.jit,
                   static_argnames=("palette_size", "hidden_size",
                                    "visual_feature_dim"))
def optimized_visual_analyzer(colors, typography_features, layout_features, fp,
                              *, palette_size, hidden_size, visual_feature_dim):
    """colors: (B, NC, 3); typography_features: (B, T); layout_features: (B, L).
    `fp` is the output of fold_params (fold once, reuse across calls)."""
    B, NC, _ = colors.shape
    half = hidden_size // 2
    V = visual_feature_dim
    T = typography_features.shape[-1]
    L = layout_features.shape[-1]
    slab_w = V + PPAD + hidden_size

    offs, sizes, _ = _bias_layout(hidden_size, visual_feature_dim)
    bt = _pick_batch_tile(B)
    grid = (B // bt,)

    colors_flat = colors.reshape(B * NC, 3).astype(jnp.float32)
    typo = typography_features.astype(jnp.float32)
    layout = layout_features.astype(jnp.float32)

    kernel = _make_kernel(bt, NC, offs, sizes)

    # activation tiles follow the batch grid axis; weights use constant index
    # maps (fetched once, VMEM-resident across batch tiles)
    def act(shape):
        return pl.BlockSpec(shape, lambda i: (i, 0))

    def const(arr):
        return pl.BlockSpec(arr.shape, lambda i: (0, 0))

    weight_args = (fp["cw1"], fp["cw2"], fp["cw3"],
                   fp["tw1"], fp["tw2"], fp["tw3"],
                   fp["lw1"], fp["lw2"], fp["lw3"],
                   fp["fw"], fp["bias"])

    in_specs = ([act((bt * NC, 3)), act((bt, T)), act((bt, L))]
                + [const(w) for w in weight_args])

    flops = 2 * (B * NC * (3 * 64 + 64 * 128 + 128 * PPAD)
                 + B * (T * 256 + 256 * 512 + 512 * half)
                 + B * (L * 256 + 256 * 512 + 512 * half)
                 + B * (PPAD + hidden_size) * V)
    bytes_accessed = (colors_flat.size * 4 + typo.size * 4 + layout.size * 4
                      + sum(int(w.size) * w.dtype.itemsize for w in weight_args)
                      + B * slab_w * 4)
    cost = pl.CostEstimate(flops=int(flops), transcendentals=int(B),
                           bytes_accessed=int(bytes_accessed))

    out = pl.pallas_call(
        kernel,
        out_shape=jax.ShapeDtypeStruct((B, slab_w), jnp.float32),
        grid=grid,
        in_specs=in_specs,
        out_specs=pl.BlockSpec((bt, slab_w), lambda i: (i, 0)),
        compiler_params=pltpu.CompilerParams(
            dimension_semantics=("parallel",)),
        cost_estimate=cost,
    )(colors_flat, typo, layout, *weight_args)

    return {
        "visual_features": out[:, :V],
        "color_palette": out[:, V:V + palette_size],
        "typography_embedding": out[:, V + PPAD:V + PPAD + half],
        "layout_embedding": out[:, V + PPAD + half:V + PPAD + hidden_size],
    }


# ----------------------------------------------------------------------------
# parameter init + references
# ----------------------------------------------------------------------------
def make_params(key, *, typography_features, layout_features, palette_size,
                hidden_size, visual_feature_dim):
    """Deterministic synthetic parameters (weights [in, out], vectors as [1, n])."""
    half = hidden_size // 2

    def w(k, i, o):
        return (jax.random.normal(k, (i, o), jnp.float32) / jnp.sqrt(i)).astype(jnp.float32)

    def v(k, n, scale=0.1):
        return (scale * jax.random.normal(k, (1, n), jnp.float32)).astype(jnp.float32)

    keys = jax.random.split(key, 32)
    return {
        "cw1": w(keys[0], 3, 64), "cb1": v(keys[1], 64),
        "bng": 1.0 + v(keys[2], 64), "bnb": v(keys[3], 64),
        "bnm": v(keys[4], 64),
        "bnv": 1.0 + 0.1 * jax.random.uniform(keys[5], (1, 64), jnp.float32),
        "cw2": w(keys[6], 64, 128), "cb2": v(keys[7], 128),
        "cw3": w(keys[8], 128, palette_size), "cb3": v(keys[9], palette_size),
        "tw1": w(keys[10], typography_features, 256), "tb1": v(keys[11], 256),
        "tw2": w(keys[12], 256, 512), "tb2": v(keys[13], 512),
        "tw3": w(keys[14], 512, half), "tb3": v(keys[15], half),
        "lw1": w(keys[16], layout_features, 256), "lb1": v(keys[17], 256),
        "lw2": w(keys[18], 256, 512), "lb2": v(keys[19], 512),
        "lw3": w(keys[20], 512, half), "lb3": v(keys[21], half),
        "fw": w(keys[22], palette_size + hidden_size, visual_feature_dim),
        "fb": v(keys[23], visual_feature_dim),
        "lng": 1.0 + v(keys[24], visual_feature_dim), "lnb": v(keys[25], visual_feature_dim),
    }


def reference_module_fp32(colors, typo, layout, p):
    """Pure-JAX, fp32, un-folded reference matching the PyTorch forward (eval mode)."""
    x = colors.reshape(-1, 3)
    h = jax.nn.relu(x @ p["cw1"] + p["cb1"])
    h = (h - p["bnm"]) / jnp.sqrt(p["bnv"] + BN_EPS) * p["bng"] + p["bnb"]
    h = jax.nn.relu(h @ p["cw2"] + p["cb2"])
    ce = h @ p["cw3"] + p["cb3"]
    cs = ce.reshape(colors.shape[0], -1, ce.shape[-1]).mean(axis=1)
    t = jax.nn.relu(typo @ p["tw1"] + p["tb1"])
    t = jax.nn.relu(t @ p["tw2"] + p["tb2"])
    te = t @ p["tw3"] + p["tb3"]
    l = jax.nn.relu(layout @ p["lw1"] + p["lb1"])
    l = jax.nn.relu(l @ p["lw2"] + p["lb2"])
    le = l @ p["lw3"] + p["lb3"]
    comb = jnp.concatenate([cs, te, le], axis=-1)
    f = comb @ p["fw"] + p["fb"]
    mu = f.mean(-1, keepdims=True)
    var = ((f - mu) ** 2).mean(-1, keepdims=True)
    vf = jax.nn.relu((f - mu) / jnp.sqrt(var + LN_EPS) * p["lng"] + p["lnb"])
    return vf, cs, te, le


def reference_folded_bf16(colors, typo, layout, fp, *, palette_size, hidden_size,
                          visual_feature_dim):
    """Pure-JAX reference of the *exact* kernel math (folded BN, merged fw, bf16)."""
    offs, sizes, _ = _bias_layout(hidden_size, visual_feature_dim)

    def b(name):
        return fp["bias"][:, offs[name]:offs[name] + sizes[name]]

    def dot(x, w):
        return jnp.dot(x.astype(jnp.bfloat16), w, preferred_element_type=jnp.float32)

    B, NC = colors.shape[0], colors.shape[1]
    x = colors.reshape(-1, 3).astype(jnp.float32)
    h = jax.nn.relu(x[:, 0:1] * fp["cw1"][0:1] + x[:, 1:2] * fp["cw1"][1:2]
                    + x[:, 2:3] * fp["cw1"][2:3] + b("cb1"))
    h = jax.nn.relu(dot(h, fp["cw2"]) + b("cb2"))
    ce = dot(h, fp["cw3"]) + b("cb3")
    cs = ce.reshape(B, NC, PPAD).mean(axis=1)

    t = jax.nn.relu(dot(typo.astype(jnp.float32), fp["tw1"]) + b("tb1"))
    t = jax.nn.relu(dot(t, fp["tw2"]) + b("tb2"))
    te = dot(t, fp["tw3"]) + b("tb3")

    l = jax.nn.relu(dot(layout.astype(jnp.float32), fp["lw1"]) + b("lb1"))
    l = jax.nn.relu(dot(l, fp["lw2"]) + b("lb2"))
    le = dot(l, fp["lw3"]) + b("lb3")

    xf = jnp.concatenate([cs, te, le], axis=-1)
    f = dot(xf, fp["fw"]) + b("fb")
    mu = f.mean(-1, keepdims=True)
    var = ((f - mu) ** 2).mean(-1, keepdims=True)
    vf = jax.nn.relu((f - mu) * jax.lax.rsqrt(var + LN_EPS) * b("lng") + b("lnb"))
    return vf, cs[:, :palette_size], te, le


if __name__ == "__main__":
    # Small, module-consistent config.
    HIDDEN = 128          # hidden_size (even)
    TYPO = 64             # typography_features
    LAYOUT = 128          # layout_features
    PALETTE = 16          # color_palette_size
    VISUAL = 256          # visual_feature_dim
    B, NC = 2, 8          # batch, colors per image

    key = jax.random.PRNGKey(0)
    k_colors, k_typo, k_layout, k_params = jax.random.split(key, 4)

    colors = jax.random.uniform(k_colors, (B, NC, 3), jnp.float32)
    typo = jax.random.normal(k_typo, (B, TYPO), jnp.float32)
    layout = jax.random.normal(k_layout, (B, LAYOUT), jnp.float32)

    params = make_params(
        k_params, typography_features=TYPO, layout_features=LAYOUT,
        palette_size=PALETTE, hidden_size=HIDDEN, visual_feature_dim=VISUAL)

    # Fold/pad/merge/cast once (amortized across calls with static weights).
    folded = fold_params(params, palette_size=PALETTE, hidden_size=HIDDEN,
                         visual_feature_dim=VISUAL)

    out = optimized_visual_analyzer(
        colors, typo, layout, folded,
        palette_size=PALETTE, hidden_size=HIDDEN, visual_feature_dim=VISUAL)
    jax.block_until_ready(out)

    # 1) Tight check vs a pure-JAX implementation of the exact kernel math.
    vf_m, cs_m, te_m, le_m = reference_folded_bf16(
        colors, typo, layout, folded, palette_size=PALETTE, hidden_size=HIDDEN,
        visual_feature_dim=VISUAL)
    assert jnp.allclose(out["visual_features"], vf_m, rtol=1e-3, atol=1e-3)
    assert jnp.allclose(out["color_palette"], cs_m, rtol=1e-3, atol=1e-3)
    assert jnp.allclose(out["typography_embedding"], te_m, rtol=1e-3, atol=1e-3)
    assert jnp.allclose(out["layout_embedding"], le_m, rtol=1e-3, atol=1e-3)

    # 2) Semantic check vs the fp32 PyTorch-equivalent forward (bf16-appropriate tol).
    vf, cs, te, le = reference_module_fp32(colors, typo, layout, params)
    assert jnp.allclose(out["visual_features"], vf, rtol=5e-2, atol=5e-2)
    assert jnp.allclose(out["color_palette"], cs, rtol=5e-2, atol=5e-2)
    assert jnp.allclose(out["typography_embedding"], te, rtol=5e-2, atol=5e-2)
    assert jnp.allclose(out["layout_embedding"], le, rtol=5e-2, atol=5e-2)

    print("KERNEL_OK")
</pallas_src>

<mosaic_0001>
module attributes {stable_mosaic.version = 11 : i64} {
  func.func @kernel(%arg0: i32, %arg1: memref<16x3xf32, #tpu.memory_space<vmem>>, %arg2: memref<2x64xf32, #tpu.memory_space<vmem>>, %arg3: memref<2x128xf32, #tpu.memory_space<vmem>>, %arg4: memref<3x64xf32, #tpu.memory_space<vmem>>, %arg5: memref<64x128xbf16, #tpu.memory_space<vmem>>, %arg6: memref<128x128xbf16, #tpu.memory_space<vmem>>, %arg7: memref<64x256xbf16, #tpu.memory_space<vmem>>, %arg8: memref<256x512xbf16, #tpu.memory_space<vmem>>, %arg9: memref<512x64xbf16, #tpu.memory_space<vmem>>, %arg10: memref<128x256xbf16, #tpu.memory_space<vmem>>, %arg11: memref<256x512xbf16, #tpu.memory_space<vmem>>, %arg12: memref<512x64xbf16, #tpu.memory_space<vmem>>, %arg13: memref<256x256xbf16, #tpu.memory_space<vmem>>, %arg14: memref<1x2944xf32, #tpu.memory_space<vmem>>, %arg15: memref<2x512xf32, #tpu.memory_space<vmem>>) attributes {dimension_semantics = [#tpu.dimension_semantics<parallel>], iteration_bounds = array<i64: 1>, scalar_prefetch = 0 : i64, scratch_operands = 0 : i64, tpu.core_type = #tpu.core_type<tc>, window_params = [{transform_indices = @transform_0, window_bounds = array<i64: 16, 3>}, {transform_indices = @transform_1, window_bounds = array<i64: 2, 64>}, {transform_indices = @transform_2, window_bounds = array<i64: 2, 128>}, {pipeline_mode = #tpu.pipeline_mode<synchronous>, transform_indices = @transform_3, window_bounds = array<i64: 3, 64>}, {pipeline_mode = #tpu.pipeline_mode<synchronous>, transform_indices = @transform_4, window_bounds = array<i64: 64, 128>}, {pipeline_mode = #tpu.pipeline_mode<synchronous>, transform_indices = @transform_5, window_bounds = array<i64: 128, 128>}, {pipeline_mode = #tpu.pipeline_mode<synchronous>, transform_indices = @transform_6, window_bounds = array<i64: 64, 256>}, {pipeline_mode = #tpu.pipeline_mode<synchronous>, transform_indices = @transform_7, window_bounds = array<i64: 256, 512>}, {pipeline_mode = #tpu.pipeline_mode<synchronous>, transform_indices = @transform_8, window_bounds = array<i64: 512, 64>}, {pipeline_mode = #tpu.pipeline_mode<synchronous>, transform_indices = @transform_9, window_bounds = array<i64: 128, 256>}, {pipeline_mode = #tpu.pipeline_mode<synchronous>, transform_indices = @transform_10, window_bounds = array<i64: 256, 512>}, {pipeline_mode = #tpu.pipeline_mode<synchronous>, transform_indices = @transform_11, window_bounds = array<i64: 512, 64>}, {pipeline_mode = #tpu.pipeline_mode<synchronous>, transform_indices = @transform_12, window_bounds = array<i64: 256, 256>}, {pipeline_mode = #tpu.pipeline_mode<synchronous>, transform_indices = @transform_13, window_bounds = array<i64: 1, 2944>}, {transform_indices = @transform_14, window_bounds = array<i64: 2, 512>}]} {
    %c0 = arith.constant 0 : index
    %c0_0 = arith.constant 0 : index
    %0 = vector.load %arg1[%c0, %c0_0] : memref<16x3xf32, #tpu.memory_space<vmem>>, vector<16x3xf32>
    %1 = vector.extract_strided_slice %0 {offsets = [0, 0], sizes = [16, 1], strides = [1, 1]} : vector<16x3xf32> to vector<16x1xf32>
    %c0_1 = arith.constant 0 : index
    %c0_2 = arith.constant 0 : index
    %2 = vector.load %arg4[%c0_1, %c0_2] : memref<3x64xf32, #tpu.memory_space<vmem>>, vector<1x64xf32>
    %3 = vector.broadcast %1 : vector<16x1xf32> to vector<16x64xf32>
    %4 = vector.broadcast %2 : vector<1x64xf32> to vector<16x64xf32>
    %5 = arith.mulf %3, %4 : vector<16x64xf32>
    %6 = vector.extract_strided_slice %0 {offsets = [0, 1], sizes = [16, 1], strides = [1, 1]} : vector<16x3xf32> to vector<16x1xf32>
    %c1 = arith.constant 1 : index
    %c0_3 = arith.constant 0 : index
    %7 = vector.load %arg4[%c1, %c0_3] : memref<3x64xf32, #tpu.memory_space<vmem>>, vector<1x64xf32>
    %8 = vector.broadcast %6 : vector<16x1xf32> to vector<16x64xf32>
    %9 = vector.broadcast %7 : vector<1x64xf32> to vector<16x64xf32>
    %10 = arith.mulf %8, %9 : vector<16x64xf32>
    %11 = arith.addf %5, %10 : vector<16x64xf32>
    %12 = vector.extract_strided_slice %0 {offsets = [0, 2], sizes = [16, 1], strides = [1, 1]} : vector<16x3xf32> to vector<16x1xf32>
    %c2 = arith.constant 2 : index
    %c0_4 = arith.constant 0 : index
    %13 = vector.load %arg4[%c2, %c0_4] : memref<3x64xf32, #tpu.memory_space<vmem>>, vector<1x64xf32>
    %14 = vector.broadcast %12 : vector<16x1xf32> to vector<16x64xf32>
    %15 = vector.broadcast %13 : vector<1x64xf32> to vector<16x64xf32>
    %16 = arith.mulf %14, %15 : vector<16x64xf32>
    %17 = arith.addf %11, %16 : vector<16x64xf32>
    %c0_5 = arith.constant 0 : index
    %c0_6 = arith.constant 0 : index
    %18 = vector.load %arg14[%c0_5, %c0_6] : memref<1x2944xf32, #tpu.memory_space<vmem>>, vector<1x64xf32>
    %19 = vector.broadcast %18 : vector<1x64xf32> to vector<16x64xf32>
    %20 = arith.addf %17, %19 : vector<16x64xf32>
    %cst = arith.constant 0.000000e+00 : f32
    %21 = vector.broadcast %cst : f32 to vector<16x64xf32>
    %22 = arith.maximumf %20, %21 : vector<16x64xf32>
    %23 = arith.truncf %22 : vector<16x64xf32> to vector<16x64xbf16>
    %c0_7 = arith.constant 0 : index
    %c0_8 = arith.constant 0 : index
    %24 = vector.load %arg5[%c0_7, %c0_8] : memref<64x128xbf16, #tpu.memory_space<vmem>>, vector<64x128xbf16>
    %cst_9 = arith.constant dense<0.000000e+00> : vector<16x128xf32>
    %25 = tpu.matmul %23, %24, %cst_9 {dimension_numbers = #tpu.dot_dimension_numbers<[1], [0], [0], [1], [0, 0, 1, 1], [], []>} : vector<16x64xbf16>, vector<64x128xbf16>, vector<16x128xf32> -> vector<16x128xf32>
    %c0_10 = arith.constant 0 : index
    %c128 = arith.constant 128 : index
    %26 = vector.load %arg14[%c0_10, %c128] : memref<1x2944xf32, #tpu.memory_space<vmem>>, vector<1x128xf32>
    %27 = vector.broadcast %26 : vector<1x128xf32> to vector<16x128xf32>
    %28 = arith.addf %25, %27 : vector<16x128xf32>
    %cst_11 = arith.constant 0.000000e+00 : f32
    %29 = vector.broadcast %cst_11 : f32 to vector<16x128xf32>
    %30 = arith.maximumf %28, %29 : vector<16x128xf32>
    %31 = arith.truncf %30 : vector<16x128xf32> to vector<16x128xbf16>
    %c0_12 = arith.constant 0 : index
    %c0_13 = arith.constant 0 : index
    %32 = vector.load %arg6[%c0_12, %c0_13] : memref<128x128xbf16, #tpu.memory_space<vmem>>, vector<128x128xbf16>
    %cst_14 = arith.constant dense<0.000000e+00> : vector<16x128xf32>
    %33 = tpu.matmul %31, %32, %cst_14 {dimension_numbers = #tpu.dot_dimension_numbers<[1], [0], [0], [1], [0, 0, 1, 1], [], []>} : vector<16x128xbf16>, vector<128x128xbf16>, vector<16x128xf32> -> vector<16x128xf32>
    %c0_15 = arith.constant 0 : index
    %c256 = arith.constant 256 : index
    %34 = vector.load %arg14[%c0_15, %c256] : memref<1x2944xf32, #tpu.memory_space<vmem>>, vector<1x128xf32>
    %35 = vector.broadcast %34 : vector<1x128xf32> to vector<16x128xf32>
    %36 = arith.addf %33, %35 : vector<16x128xf32>
    %37 = vector.shape_cast %36 : vector<16x128xf32> to vector<2x8x128xf32>
    %cst_16 = arith.constant dense<0.000000e+00> : vector<2x128xf32>
    %38 = vector.multi_reduction <add>, %37, %cst_16 [1] : vector<2x8x128xf32> to vector<2x128xf32>
    %cst_17 = arith.constant 8.000000e+00 : f32
    %39 = vector.broadcast %cst_17 : f32 to vector<2x128xf32>
    %40 = arith.divf %38, %39 : vector<2x128xf32>
    %c0_18 = arith.constant 0 : index
    %c0_19 = arith.constant 0 : index
    %41 = vector.load %arg2[%c0_18, %c0_19] : memref<2x64xf32, #tpu.memory_space<vmem>>, vector<2x64xf32>
    %42 = arith.truncf %41 : vector<2x64xf32> to vector<2x64xbf16>
    %c0_20 = arith.constant 0 : index
    %c0_21 = arith.constant 0 : index
    %43 = vector.load %arg7[%c0_20, %c0_21] : memref<64x256xbf16, #tpu.memory_space<vmem>>, vector<64x256xbf16>
    %cst_22 = arith.constant dense<0.000000e+00> : vector<2x256xf32>
    %44 = tpu.matmul %42, %43, %cst_22 {dimension_numbers = #tpu.dot_dimension_numbers<[1], [0], [0], [1], [0, 0, 1, 1], [], []>} : vector<2x64xbf16>, vector<64x256xbf16>, vector<2x256xf32> -> vector<2x256xf32>
    %c0_23 = arith.constant 0 : index
    %c384 = arith.constant 384 : index
    %45 = vector.load %arg14[%c0_23, %c384] : memref<1x2944xf32, #tpu.memory_space<vmem>>, vector<1x256xf32>
    %46 = vector.broadcast %45 : vector<1x256xf32> to vector<2x256xf32>
    %47 = arith.addf %44, %46 : vector<2x256xf32>
    %cst_24 = arith.constant 0.000000e+00 : f32
    %48 = vector.broadcast %cst_24 : f32 to vector<2x256xf32>
    %49 = arith.maximumf %47, %48 : vector<2x256xf32>
    %50 = arith.truncf %49 : vector<2x256xf32> to vector<2x256xbf16>
    %c0_25 = arith.constant 0 : index
    %c0_26 = arith.constant 0 : index
    %51 = vector.load %arg8[%c0_25, %c0_26] : memref<256x512xbf16, #tpu.memory_space<vmem>>, vector<256x512xbf16>
    %cst_27 = arith.constant dense<0.000000e+00> : vector<2x512xf32>
    %52 = tpu.matmul %50, %51, %cst_27 {dimension_numbers = #tpu.dot_dimension_numbers<[1], [0], [0], [1], [0, 0, 1, 1], [], []>} : vector<2x256xbf16>, vector<256x512xbf16>, vector<2x512xf32> -> vector<2x512xf32>
    %c0_28 = arith.constant 0 : index
    %c640 = arith.constant 640 : index
    %53 = vector.load %arg14[%c0_28, %c640] : memref<1x2944xf32, #tpu.memory_space<vmem>>, vector<1x512xf32>
    %54 = vector.broadcast %53 : vector<1x512xf32> to vector<2x512xf32>
    %55 = arith.addf %52, %54 : vector<2x512xf32>
    %cst_29 = arith.constant 0.000000e+00 : f32
    %56 = vector.broadcast %cst_29 : f32 to vector<2x512xf32>
    %57 = arith.maximumf %55, %56 : vector<2x512xf32>
    %58 = arith.truncf %57 : vector<2x512xf32> to vector<2x512xbf16>
    %c0_30 = arith.constant 0 : index
    %c0_31 = arith.constant 0 : index
    %59 = vector.load %arg9[%c0_30, %c0_31] : memref<512x64xbf16, #tpu.memory_space<vmem>>, vector<512x64xbf16>
    %cst_32 = arith.constant dense<0.000000e+00> : vector<2x64xf32>
    %60 = tpu.matmul %58, %59, %cst_32 {dimension_numbers = #tpu.dot_dimension_numbers<[1], [0], [0], [1], [0, 0, 1, 1], [], []>} : vector<2x512xbf16>, vector<512x64xbf16>, vector<2x64xf32> -> vector<2x64xf32>
    %c0_33 = arith.constant 0 : index
    %c1152 = arith.constant 1152 : index
    %61 = vector.load %arg14[%c0_33, %c1152] : memref<1x2944xf32, #tpu.memory_space<vmem>>, vector<1x64xf32>
    %62 = vector.broadcast %61 : vector<1x64xf32> to vector<2x64xf32>
    %63 = arith.addf %60, %62 : vector<2x64xf32>
    %c0_34 = arith.constant 0 : index
    %c0_35 = arith.constant 0 : index
    %64 = vector.load %arg3[%c0_34, %c0_35] : memref<2x128xf32, #tpu.memory_space<vmem>>, vector<2x128xf32>
    %65 = arith.truncf %64 : vector<2x128xf32> to vector<2x128xbf16>
    %c0_36 = arith.constant 0 : index
    %c0_37 = arith.constant 0 : index
    %66 = vector.load %arg10[%c0_36, %c0_37] : memref<128x256xbf16, #tpu.memory_space<vmem>>, vector<128x256xbf16>
    %cst_38 = arith.constant dense<0.000000e+00> : vector<2x256xf32>
    %67 = tpu.matmul %65, %66, %cst_38 {dimension_numbers = #tpu.dot_dimension_numbers<[1], [0], [0], [1], [0, 0, 1, 1], [], []>} : vector<2x128xbf16>, vector<128x256xbf16>, vector<2x256xf32> -> vector<2x256xf32>
    %c0_39 = arith.constant 0 : index
    %c1280 = arith.constant 1280 : index
    %68 = vector.load %arg14[%c0_39, %c1280] : memref<1x2944xf32, #tpu.memory_space<vmem>>, vector<1x256xf32>
    %69 = vector.broadcast %68 : vector<1x256xf32> to vector<2x256xf32>
    %70 = arith.addf %67, %69 : vector<2x256xf32>
    %cst_40 = arith.constant 0.000000e+00 : f32
    %71 = vector.broadcast %cst_40 : f32 to vector<2x256xf32>
    %72 = arith.maximumf %70, %71 : vector<2x256xf32>
    %73 = arith.truncf %72 : vector<2x256xf32> to vector<2x256xbf16>
    %c0_41 = arith.constant 0 : index
    %c0_42 = arith.constant 0 : index
    %74 = vector.load %arg11[%c0_41, %c0_42] : memref<256x512xbf16, #tpu.memory_space<vmem>>, vector<256x512xbf16>
    %cst_43 = arith.constant dense<0.000000e+00> : vector<2x512xf32>
    %75 = tpu.matmul %73, %74, %cst_43 {dimension_numbers = #tpu.dot_dimension_numbers<[1], [0], [0], [1], [0, 0, 1, 1], [], []>} : vector<2x256xbf16>, vector<256x512xbf16>, vector<2x512xf32> -> vector<2x512xf32>
    %c0_44 = arith.constant 0 : index
    %c1536 = arith.constant 1536 : index
    %76 = vector.load %arg14[%c0_44, %c1536] : memref<1x2944xf32, #tpu.memory_space<vmem>>, vector<1x512xf32>
    %77 = vector.broadcast %76 : vector<1x512xf32> to vector<2x512xf32>
    %78 = arith.addf %75, %77 : vector<2x512xf32>
    %cst_45 = arith.constant 0.000000e+00 : f32
    %79 = vector.broadcast %cst_45 : f32 to vector<2x512xf32>
    %80 = arith.maximumf %78, %79 : vector<2x512xf32>
    %81 = arith.truncf %80 : vector<2x512xf32> to vector<2x512xbf16>
    %c0_46 = arith.constant 0 : index
    %c0_47 = arith.constant 0 : index
    %82 = vector.load %arg12[%c0_46, %c0_47] : memref<512x64xbf16, #tpu.memory_space<vmem>>, vector<512x64xbf16>
    %cst_48 = arith.constant dense<0.000000e+00> : vector<2x64xf32>
    %83 = tpu.matmul %81, %82, %cst_48 {dimension_numbers = #tpu.dot_dimension_numbers<[1], [0], [0], [1], [0, 0, 1, 1], [], []>} : vector<2x512xbf16>, vector<512x64xbf16>, vector<2x64xf32> -> vector<2x64xf32>
    %c0_49 = arith.constant 0 : index
    %c2048 = arith.constant 2048 : index
    %84 = vector.load %arg14[%c0_49, %c2048] : memref<1x2944xf32, #tpu.memory_space<vmem>>, vector<1x64xf32>
    %85 = vector.broadcast %84 : vector<1x64xf32> to vector<2x64xf32>
    %86 = arith.addf %83, %85 : vector<2x64xf32>
    %87 = tpu.concatenate %40, %63, %86 in 1 : vector<2x128xf32>, vector<2x64xf32>, vector<2x64xf32> -> vector<2x256xf32>
    %88 = arith.truncf %87 : vector<2x256xf32> to vector<2x256xbf16>
    %c0_50 = arith.constant 0 : index
    %c0_51 = arith.constant 0 : index
    %89 = vector.load %arg13[%c0_50, %c0_51] : memref<256x256xbf16, #tpu.memory_space<vmem>>, vector<256x256xbf16>
    %cst_52 = arith.constant dense<0.000000e+00> : vector<2x256xf32>
    %90 = tpu.matmul %88, %89, %cst_52 {dimension_numbers = #tpu.dot_dimension_numbers<[1], [0], [0], [1], [0, 0, 1, 1], [], []>} : vector<2x256xbf16>, vector<256x256xbf16>, vector<2x256xf32> -> vector<2x256xf32>
    %c0_53 = arith.constant 0 : index
    %c2176 = arith.constant 2176 : index
    %91 = vector.load %arg14[%c0_53, %c2176] : memref<1x2944xf32, #tpu.memory_space<vmem>>, vector<1x256xf32>
    %92 = vector.broadcast %91 : vector<1x256xf32> to vector<2x256xf32>
    %93 = arith.addf %90, %92 : vector<2x256xf32>
    %cst_54 = arith.constant dense<0.000000e+00> : vector<2xf32>
    %94 = vector.multi_reduction <add>, %93, %cst_54 [1] : vector<2x256xf32> to vector<2xf32>
    %95 = vector.shape_cast %94 : vector<2xf32> to vector<2x1xf32>
    %cst_55 = arith.constant 2.560000e+02 : f32
    %96 = vector.broadcast %cst_55 : f32 to vector<2x1xf32>
    %97 = arith.divf %95, %96 : vector<2x1xf32>
    %98 = vector.broadcast %97 : vector<2x1xf32> to vector<2x256xf32>
    %99 = arith.subf %93, %98 : vector<2x256xf32>
    %100 = arith.mulf %99, %99 : vector<2x256xf32>
    %cst_56 = arith.constant dense<0.000000e+00> : vector<2xf32>
    %101 = vector.multi_reduction <add>, %100, %cst_56 [1] : vector<2x256xf32> to vector<2xf32>
    %102 = vector.shape_cast %101 : vector<2xf32> to vector<2x1xf32>
    %cst_57 = arith.constant 2.560000e+02 : f32
    %103 = vector.broadcast %cst_57 : f32 to vector<2x1xf32>
    %104 = arith.divf %102, %103 : vector<2x1xf32>
    %105 = vector.broadcast %97 : vector<2x1xf32> to vector<2x256xf32>
    %106 = arith.subf %93, %105 : vector<2x256xf32>
    %cst_58 = arith.constant 9.99999974E-6 : f32
    %107 = vector.broadcast %cst_58 : f32 to vector<2x1xf32>
    %108 = arith.addf %104, %107 : vector<2x1xf32>
    %109 = math.rsqrt %108 : vector<2x1xf32>
    %110 = vector.broadcast %109 : vector<2x1xf32> to vector<2x256xf32>
    %111 = arith.mulf %106, %110 : vector<2x256xf32>
    %c0_59 = arith.constant 0 : index
    %c2432 = arith.constant 2432 : index
    %112 = vector.load %arg14[%c0_59, %c2432] : memref<1x2944xf32, #tpu.memory_space<vmem>>, vector<1x256xf32>
    %113 = vector.broadcast %112 : vector<1x256xf32> to vector<2x256xf32>
    %114 = arith.mulf %111, %113 : vector<2x256xf32>
    %c0_60 = arith.constant 0 : index
    %c2688 = arith.constant 2688 : index
    %115 = vector.load %arg14[%c0_60, %c2688] : memref<1x2944xf32, #tpu.memory_space<vmem>>, vector<1x256xf32>
    %116 = vector.broadcast %115 : vector<1x256xf32> to vector<2x256xf32>
    %117 = arith.addf %114, %116 : vector<2x256xf32>
    %cst_61 = arith.constant 0.000000e+00 : f32
    %118 = vector.broadcast %cst_61 : f32 to vector<2x256xf32>
    %119 = arith.maximumf %117, %118 : vector<2x256xf32>
    %120 = tpu.concatenate %119, %40, %63, %86 in 1 : vector<2x256xf32>, vector<2x128xf32>, vector<2x64xf32>, vector<2x64xf32> -> vector<2x512xf32>
    %c0_62 = arith.constant 0 : index
    %c0_63 = arith.constant 0 : index
    %121 = vector.load %arg15[%c0_62, %c0_63] : memref<2x512xf32, #tpu.memory_space<vmem>>, vector<2x512xf32>
    tpu.vector_store %arg15[%c0_62, %c0_63], %120 {strides = array<i32>} : memref<2x512xf32, #tpu.memory_space<vmem>>, vector<2x512xf32>,
    return
  }
  func.func @transform_0(%arg0: i32) -> (i32, i32) {
    %c0_i32 = arith.constant 0 : i32
    %c0_i32_0 = arith.constant 0 : i32
    return %arg0, %c0_i32 : i32, i32
  }
  func.func @transform_1(%arg0: i32) -> (i32, i32) {
    %c0_i32 = arith.constant 0 : i32
    %c0_i32_0 = arith.constant 0 : i32
    return %arg0, %c0_i32 : i32, i32
  }
  func.func @transform_2(%arg0: i32) -> (i32, i32) {
    %c0_i32 = arith.constant 0 : i32
    %c0_i32_0 = arith.constant 0 : i32
    return %arg0, %c0_i32 : i32, i32
  }
  func.func @transform_3(%arg0: i32) -> (i32, i32) {
    %c0_i32 = arith.constant 0 : i32
    %c0_i32_0 = arith.constant 0 : i32
    %c0_i32_1 = arith.constant 0 : i32
    return %c0_i32, %c0_i32_0 : i32, i32
  }
  func.func @transform_4(%arg0: i32) -> (i32, i32) {
    %c0_i32 = arith.constant 0 : i32
    %c0_i32_0 = arith.constant 0 : i32
    %c0_i32_1 = arith.constant 0 : i32
    return %c0_i32, %c0_i32_0 : i32, i32
  }
  func.func @transform_5(%arg0: i32) -> (i32, i32) {
    %c0_i32 = arith.constant 0 : i32
    %c0_i32_0 = arith.constant 0 : i32
    %c0_i32_1 = arith.constant 0 : i32
    return %c0_i32, %c0_i32_0 : i32, i32
  }
  func.func @transform_6(%arg0: i32) -> (i32, i32) {
    %c0_i32 = arith.constant 0 : i32
    %c0_i32_0 = arith.constant 0 : i32
    %c0_i32_1 = arith.constant 0 : i32
    return %c0_i32, %c0_i32_0 : i32, i32
  }
  func.func @transform_7(%arg0: i32) -> (i32, i32) {
    %c0_i32 = arith.constant 0 : i32
    %c0_i32_0 = arith.constant 0 : i32
    %c0_i32_1 = arith.constant 0 : i32
    return %c0_i32, %c0_i32_0 : i32, i32
  }
  func.func @transform_8(%arg0: i32) -> (i32, i32) {
    %c0_i32 = arith.constant 0 : i32
    %c0_i32_0 = arith.constant 0 : i32
    %c0_i32_1 = arith.constant 0 : i32
    return %c0_i32, %c0_i32_0 : i32, i32
  }
  func.func @transform_9(%arg0: i32) -> (i32, i32) {
    %c0_i32 = arith.constant 0 : i32
    %c0_i32_0 = arith.constant 0 : i32
    %c0_i32_1 = arith.constant 0 : i32
    return %c0_i32, %c0_i32_0 : i32, i32
  }
  func.func @transform_10(%arg0: i32) -> (i32, i32) {
    %c0_i32 = arith.constant 0 : i32
    %c0_i32_0 = arith.constant 0 : i32
    %c0_i32_1 = arith.constant 0 : i32
    return %c0_i32, %c0_i32_0 : i32, i32
  }
  func.func @transform_11(%arg0: i32) -> (i32, i32) {
    %c0_i32 = arith.constant 0 : i32
    %c0_i32_0 = arith.constant 0 : i32
    %c0_i32_1 = arith.constant 0 : i32
    return %c0_i32, %c0_i32_0 : i32, i32
  }
  func.func @transform_12(%arg0: i32) -> (i32, i32) {
    %c0_i32 = arith.constant 0 : i32
    %c0_i32_0 = arith.constant 0 : i32
    %c0_i32_1 = arith.constant 0 : i32
    return %c0_i32, %c0_i32_0 : i32, i32
  }
  func.func @transform_13(%arg0: i32) -> (i32, i32) {
    %c0_i32 = arith.constant 0 : i32
    %c0_i32_0 = arith.constant 0 : i32
    %c0_i32_1 = arith.constant 0 : i32
    return %c0_i32, %c0_i32_0 : i32, i32
  }
  func.func @transform_14(%arg0: i32) -> (i32, i32) {
    %c0_i32 = arith.constant 0 : i32
    %c0_i32_0 = arith.constant 0 : i32
    return %arg0, %c0_i32 : i32, i32
  }
}

</mosaic_0001>

<llo_original>
// kernel: optimized_visual_analyzer.1
$region0: #{optimized_visual_analyzer.1}
  #allocation0 [shape = 'u32[]', space=smem, size = 0x4, offset = 0x4, fixed_abs, tag = 'smem constant byte address 0x4 - core index']
  #allocation1 [shape = 'u32[144,128]{1,0:T(1,128)}', space=vmem, size = 0x12000, scoped, tag = 'internal scratch']
  %s0 = inlined_call_operand.vmem [shape: f32[16,3], index: 0, kind: input, shape index: {}]
  %s1 = inlined_call_operand.vmem [shape: f32[2,64], index: 1, kind: input, shape index: {}]
  %s2 = inlined_call_operand.vmem [shape: f32[2,128], index: 2, kind: input, shape index: {}]
  %s3 = inlined_call_operand.vmem [shape: f32[3,64], index: 3, kind: input, shape index: {}]
  %s4 = inlined_call_operand.vmem [shape: bf16[64,128], index: 4, kind: input, shape index: {}]
  %s5 = inlined_call_operand.hbm [shape: bf16[128,128], index: 5, kind: input, shape index: {}]
  %s6 = inlined_call_operand.hbm [shape: bf16[64,256], index: 6, kind: input, shape index: {}]
  %s7 = inlined_call_operand.vmem [shape: bf16[256,512], index: 7, kind: input, shape index: {}]
  %s8 = inlined_call_operand.vmem [shape: bf16[512,64], index: 8, kind: input, shape index: {}]
  %s9 = inlined_call_operand.hbm [shape: bf16[128,256], index: 9, kind: input, shape index: {}]
  %s10 = inlined_call_operand.hbm [shape: bf16[256,512], index: 10, kind: input, shape index: {}]
  %s11 = inlined_call_operand.vmem [shape: bf16[512,64], index: 11, kind: input, shape index: {}]
  %s12 = inlined_call_operand.vmem [shape: bf16[256,256], index: 12, kind: input, shape index: {}]
  %s13 = inlined_call_operand.hbm [shape: f32[1,2944], index: 13, kind: input, shape index: {}]
  %s14 = inlined_call_operand.vmem [shape: f32[2,512], index: 14, kind: output, shape index: {}]
  %s15 = sld [smem:[#allocation0]]
  $region86: #{optimized_visual_analyzer.1} parent=0
    _
  %s17 = ssub.s32 1, %s15
  %s18 = scalar_select 0, %s17, %s15
  $region1: #{optimized_visual_analyzer.1} parent=0
    #allocation2 [shape = 'u8[32768]{0}', space=vmem, size = 0x8000, scoped, tag = 'input window, operand 5, single buffered']
    #allocation3 [shape = 's32[1]{0}', space=sflag, size = 0x4, scoped, tag = 'scoped memory for optimized_visual_analyzer.1']
    #allocation4 [shape = 'u8[32768]{0}', space=vmem, size = 0x8000, scoped, tag = 'input window, operand 6, single buffered']
    #allocation5 [shape = 's32[1]{0}', space=sflag, size = 0x4, scoped, tag = 'scoped memory for optimized_visual_analyzer.1']
    #allocation6 [shape = 'u8[65536]{0}', space=vmem, size = 0x10000, scoped, tag = 'input window, operand 9, single buffered']
    #allocation7 [shape = 'u8[262144]{0}', space=vmem, size = 0x40000, scoped, tag = 'input window, operand 10, single buffered']
    #allocation8 [shape = 's32[1]{0}', space=sflag, size = 0x4, scoped, tag = 'scoped memory for optimized_visual_analyzer.1']
    #allocation9 [shape = 'u8[11776]{0}', space=vmem, size = 0x3000, scoped, tag = 'input window, operand 13, single buffered']
    %19 = vsyncpa [#allocation3], 0
    %20 = vsyncpa [#allocation5], 0
    %21 = vsyncpa [#allocation8], 0
    // Predicated region
    $region2: #{optimized_visual_analyzer.1} parent=1 // pred_check
      _
    $region3: #{optimized_visual_analyzer.1} parent=1 // pred_check_branch
      %23 = sbr.rel (0) target = $region5
    $region4: #{optimized_visual_analyzer.1} parent=1 // pred_region
      _
    $region5: #{optimized_visual_analyzer.1} parent=1 // pred_fallthru
      _
    // Predicated region
    $region6: #{optimized_visual_analyzer.1} parent=1 // pred_check
      _
    $region7: #{optimized_visual_analyzer.1} parent=1 // pred_check_branch
      %25 = sbr.rel (0) target = $region9
    $region8: #{optimized_visual_analyzer.1} parent=1 // pred_region
      _
    $region9: #{optimized_visual_analyzer.1} parent=1 // pred_fallthru
      _
    // Predicated region
    $region10: #{optimized_visual_analyzer.1} parent=1 // pred_check
      _
    $region11: #{optimized_visual_analyzer.1} parent=1 // pred_check_branch
      %27 = sbr.rel (0) target = $region13
    $region12: #{optimized_visual_analyzer.1} parent=1 // pred_region
      _
    $region13: #{optimized_visual_analyzer.1} parent=1 // pred_fallthru
      _
    // Predicated region
    $region14: #{optimized_visual_analyzer.1} parent=1 // pred_check
      _
    $region15: #{optimized_visual_analyzer.1} parent=1 // pred_check_branch
      %29 = sbr.rel (0) target = $region17
    $region16: #{optimized_visual_analyzer.1} parent=1 // pred_region
      _
    $region17: #{optimized_visual_analyzer.1} parent=1 // pred_fallthru
      _
    // Predicated region
    $region18: #{optimized_visual_analyzer.1} parent=1 // pred_check
      _
    $region19: #{optimized_visual_analyzer.1} parent=1 // pred_check_branch
      %31 = sbr.rel (0) target = $region21
    $region20: #{optimized_visual_analyzer.1} parent=1 // pred_region
      _
    $region21: #{optimized_visual_analyzer.1} parent=1 // pred_fallthru
      _
    // Predicated region
    $region22: #{optimized_visual_analyzer.1} parent=1 // pred_check
      _
    $region23: #{optimized_visual_analyzer.1} parent=1 // pred_check_branch
      %33 = sbr.rel (0) target = $region25
    $region24: #{optimized_visual_analyzer.1} parent=1 // pred_region
      %s35 = ssub.s32 1024, 1024
      %36 = vsyncadd [#allocation3], %s35
      %s37 = sshll.u32 [#allocation2], 4
      %s38 = int_to_ptr.vmem [resolvable:$true] %s37
      %43 = dma.hbm_to_vmem [thread:$0]  %s5, 1024, %s38, [#allocation3], 64, 64, 4
    $region25: #{optimized_visual_analyzer.1} parent=1 // pred_fallthru
      _
    // Predicated region
    $region26: #{optimized_visual_analyzer.1} parent=1 // pred_check
      _
    $region27: #{optimized_visual_analyzer.1} parent=1 // pred_check_branch
      %45 = sbr.rel (0) target = $region29
    $region28: #{optimized_visual_analyzer.1} parent=1 // pred_region
      %s47 = ssub.s32 1024, 1024
      %48 = vsyncadd [#allocation5], %s47
      %s49 = sshll.u32 [#allocation4], 4
      %s50 = int_to_ptr.vmem [resolvable:$true] %s49
      %55 = dma.hbm_to_vmem [thread:$0]  %s6, 1024, %s50, [#allocation5], 128, 128, 8
    $region29: #{optimized_visual_analyzer.1} parent=1 // pred_fallthru
      _
    // Predicated region
    $region30: #{optimized_visual_analyzer.1} parent=1 // pred_check
      _
    $region31: #{optimized_visual_analyzer.1} parent=1 // pred_check_branch
      %57 = sbr.rel (0) target = $region33
    $region32: #{optimized_visual_analyzer.1} parent=1 // pred_region
      _
    $region33: #{optimized_visual_analyzer.1} parent=1 // pred_fallthru
      _
    // Predicated region
    $region34: #{optimized_visual_analyzer.1} parent=1 // pred_check
      _
    $region35: #{optimized_visual_analyzer.1} parent=1 // pred_check_branch
      %59 = sbr.rel (0) target = $region37
    $region36: #{optimized_visual_analyzer.1} parent=1 // pred_region
      _
    $region37: #{optimized_visual_analyzer.1} parent=1 // pred_fallthru
      _
    // Predicated region
    $region38: #{optimized_visual_analyzer.1} parent=1 // pred_check
      _
    $region39: #{optimized_visual_analyzer.1} parent=1 // pred_check_branch
      %61 = sbr.rel (0) target = $region41
    $region40: #{optimized_visual_analyzer.1} parent=1 // pred_region
      %s63 = ssub.s32 2048, 2048
      %64 = vsyncadd [#allocation5], %s63
      %s65 = sshll.u32 [#allocation6], 4
      %s66 = int_to_ptr.vmem [resolvable:$true] %s65
      %71 = dma.hbm_to_vmem [thread:$0]  %s9, 2048, %s66, [#allocation5], 128, 128, 8
    $region41: #{optimized_visual_analyzer.1} parent=1 // pred_fallthru
      _
    // Predicated region
    $region42: #{optimized_visual_analyzer.1} parent=1 // pred_check
      _
    $region43: #{optimized_visual_analyzer.1} parent=1 // pred_check_branch
      %73 = sbr.rel (0) target = $region45
    $region44: #{optimized_visual_analyzer.1} parent=1 // pred_region
      %s75 = ssub.s32 8192, 8192
      %76 = vsyncadd [#allocation8], %s75
      %s77 = sshll.u32 [#allocation7], 4
      %s78 = int_to_ptr.vmem [resolvable:$true] %s77
      %83 = dma.hbm_to_vmem [thread:$0]  %s10, 8192, %s78, [#allocation8], 256, 256, 16
    $region45: #{optimized_visual_analyzer.1} parent=1 // pred_fallthru
      _
    // Predicated region
    $region46: #{optimized_visual_analyzer.1} parent=1 // pred_check
      _
    $region47: #{optimized_visual_analyzer.1} parent=1 // pred_check_branch
      %85 = sbr.rel (0) target = $region49
    $region48: #{optimized_visual_analyzer.1} parent=1 // pred_region
      _
    $region49: #{optimized_visual_analyzer.1} parent=1 // pred_fallthru
      _
    // Predicated region
    $region50: #{optimized_visual_analyzer.1} parent=1 // pred_check
      _
    $region51: #{optimized_visual_analyzer.1} parent=1 // pred_check_branch
      %87 = sbr.rel (0) target = $region53
    $region52: #{optimized_visual_analyzer.1} parent=1 // pred_region
      _
    $region53: #{optimized_visual_analyzer.1} parent=1 // pred_fallthru
      _
    // Predicated region
    $region54: #{optimized_visual_analyzer.1} parent=1 // pred_check
      _
    $region55: #{optimized_visual_analyzer.1} parent=1 // pred_check_branch
      %89 = sbr.rel (0) target = $region57
    $region56: #{optimized_visual_analyzer.1} parent=1 // pred_region
      %s91 = ssub.s32 368, 368
      %92 = vsyncadd [#allocation8], %s91
      %s94 = sshll.u32 [#allocation9], 4
      %s95 = int_to_ptr.vmem [resolvable:$true] %s94
      %97 = dma.hbm_to_vmem [thread:$0]  %s13, 368, %s95, [#allocation8]
    $region57: #{optimized_visual_analyzer.1} parent=1 // pred_fallthru
      _
    // Predicated region
    $region58: #{optimized_visual_analyzer.1} parent=1 // pred_check
      _
    $region59: #{optimized_visual_analyzer.1} parent=1 // pred_check_branch
      %99 = sbr.rel (0) target = $region61
    $region60: #{optimized_visual_analyzer.1} parent=1 // pred_region
      %100 = dma.done [#allocation3], 1024
    $region61: #{optimized_visual_analyzer.1} parent=1 // pred_fallthru
      _
    // Predicated region
    $region62: #{optimized_visual_analyzer.1} parent=1 // pred_check
      _
    $region63: #{optimized_visual_analyzer.1} parent=1 // pred_check_branch
      %102 = sbr.rel (0) target = $region65
    $region64: #{optimized_visual_analyzer.1} parent=1 // pred_region
      %103 = dma.done [#allocation5], 1024
    $region65: #{optimized_visual_analyzer.1} parent=1 // pred_fallthru
      _
    // Predicated region
    $region66: #{optimized_visual_analyzer.1} parent=1 // pred_check
      _
    $region67: #{optimized_visual_analyzer.1} parent=1 // pred_check_branch
      %105 = sbr.rel (0) target = $region69
    $region68: #{optimized_visual_analyzer.1} parent=1 // pred_region
      %106 = dma.done [#allocation5], 2048
    $region69: #{optimized_visual_analyzer.1} parent=1 // pred_fallthru
      _
    // Predicated region
    $region70: #{optimized_visual_analyzer.1} parent=1 // pred_check
      _
    $region71: #{optimized_visual_analyzer.1} parent=1 // pred_check_branch
      %108 = sbr.rel (0) target = $region73
    $region72: #{optimized_visual_analyzer.1} parent=1 // pred_region
      %109 = dma.done [#allocation8], 8192
    $region73: #{optimized_visual_analyzer.1} parent=1 // pred_fallthru
      _
    // Predicated region
    $region74: #{optimized_visual_analyzer.1} parent=1 // pred_check
      _
    $region75: #{optimized_visual_analyzer.1} parent=1 // pred_check_branch
      %111 = sbr.rel (0) target = $region77
    $region76: #{optimized_visual_analyzer.1} parent=1 // pred_region
      %112 = dma.done [#allocation8], 368
    $region77: #{optimized_visual_analyzer.1} parent=1 // pred_fallthru
      _
    %v114 = vld [vmem:[%s0] sm:$0xff]
    %v115 = vld [vmem:[%s0 + $0x8] sm:$0xff]
    %v116 = vld [vmem:[%s3] sm:$0x1]
    %118 = vset.pattern.permute.xlu0 0
    %119 = vperm.xlu0 %118, %v114
    %v120 = vpop.permute.xlu0 %119
    %123 = vset.pattern.permute.xlu0 0
    %124 = vperm.xlu0 %123, %v115
    %v125 = vpop.permute.xlu0 %124
    %v127 = vlaneseq
    %v128 = vshrl.u32 %v127, 7
    %v129 = vsub.s32 0, %v128
    %v130 = vrot.slane %v116, %v129
    %v131 = vmul.f32 %v120, %v130
    %v132 = vmul.f32 %v125, %v130
    %v133 = vld [vmem:[%s3 + $0x1] sm:$0x1]
    %134 = vset.pattern.permute.xlu0 1
    %135 = vperm.xlu0 %134, %v114
    %v136 = vpop.permute.xlu0 %135
    %138 = vset.pattern.permute.xlu0 1
    %139 = vperm.xlu0 %138, %v115
    %v140 = vpop.permute.xlu0 %139
    %v142 = vlaneseq
    %v143 = vshrl.u32 %v142, 7
    %v144 = vsub.s32 0, %v143
    %v145 = vrot.slane %v133, %v144
    %v146 = vmul.f32 %v136, %v145
    %v147 = vmul.f32 %v140, %v145
    %v148 = vadd.f32 %v131, %v146
    %v149 = vadd.f32 %v132, %v147
    %v150 = vld [vmem:[%s3 + $0x2] sm:$0x1]
    %151 = vset.pattern.permute.xlu0 2
    %152 = vperm.xlu0 %151, %v114
    %v153 = vpop.permute.xlu0 %152
    %155 = vset.pattern.permute.xlu0 2
    %156 = vperm.xlu0 %155, %v115
    %v157 = vpop.permute.xlu0 %156
    %v159 = vlaneseq
    %v160 = vshrl.u32 %v159, 7
    %v161 = vsub.s32 0, %v160
    %v162 = vrot.slane %v150, %v161
    %v163 = vmul.f32 %v153, %v162
    %v164 = vmul.f32 %v157, %v162
    %v165 = vadd.f32 %v148, %v163
    %v166 = vadd.f32 %v149, %v164
    %v167 = vld [vmem:[#allocation9] sm:$0x1]
    %v169 = vlaneseq
    %v170 = vshrl.u32 %v169, 7
    %v171 = vsub.s32 0, %v170
    %v172 = vrot.slane %v167, %v171
    %v174 = vadd.f32 %v165, %v172
    %v175 = vadd.f32 %v166, %v172
    %v176 = vmax.f32 %v174, 0.0
    %v177 = vmax.f32 %v175, 0.0
    %v178 = vpack.c.bf16 %v177, %v176
    %v179 = vld [vmem:[%s4] sm:$0xf]
    %v180 = vld [vmem:[%s4 + $0x4] sm:$0xf]
    %v181 = vld [vmem:[%s4 + $0x8] sm:$0xf]
    %v182 = vld [vmem:[%s4 + $0xc] sm:$0xf]
    %v183 = vld [vmem:[%s4 + $0x10] sm:$0xf]
    %v184 = vld [vmem:[%s4 + $0x14] sm:$0xf]
    %v185 = vld [vmem:[%s4 + $0x18] sm:$0xf]
    %v186 = vld [vmem:[%s4 + $0x1c] sm:$0xf]
    %v187 = vld [vmem:[#allocation9 + $0x1] sm:$0x1]
    %v189 = vlaneseq
    %v190 = vshrl.u32 %v189, 7
    %v191 = vsub.s32 0, %v190
    %v192 = vrot.slane %v187, %v191
    %v202 = vunpack.c.l.b16 %v179
    %v203 = vunpack.c.l.b16 %v180
    %v204 = vunpack.c.l.b16 %v181
    %v205 = vunpack.c.l.b16 %v182
    %v206 = vunpack.c.l.b16 %v183
    %v207 = vunpack.c.l.b16 %v184
    %v208 = vunpack.c.l.b16 %v185
    %v209 = vunpack.c.l.b16 %v186
    %v210 = vpack.c.b16 %v203, %v202
    %v211 = vpack.c.b16 %v205, %v204
    %v212 = vpack.c.b16 %v207, %v206
    %v213 = vpack.c.b16 %v209, %v208
    %vm218 = vcmask 523264
    %v220 = vsel %vm218, %v178, 0
    %222 = vmatprep.subr.bf16.mxu0 0
    %223 = vmatpush1.bf16.msra.mxu0 0
    %224 = vmatprep.subr.bf16.mxu0 0
    %225 = vmatpush1.bf16.msra.mxu0 0
    %226 = vmatprep.subr.bf16.mxu0 0
    %227 = vmatpush1.bf16.msra.mxu0 0
    %228 = vmatprep.subr.bf16.mxu0 0
    %229 = vmatpush1.bf16.msra.mxu0 0
    %230 = vmatprep.subr.bf16.mxu0 0
    %231 = vmatpush1.bf16.msra.mxu0 %v213
    %232 = vmatprep.subr.bf16.mxu0 0
    %233 = vmatpush1.bf16.msra.mxu0 %v212
    %234 = vmatprep.subr.bf16.mxu0 0
    %235 = vmatpush1.bf16.msra.mxu0 %v211
    %236 = vmatprep.subr.bf16.mxu0 0
    %237 = vmatpush1.bf16.msra.mxu0 %v210
    %238 = vmatprep.subr.bf16.mxu0 0
    %239 = vmatpush2.bf16.msra.mxu0 0
    %240 = vmatprep.subr.bf16.mxu0 0
    %241 = vmatpush2.bf16.msra.mxu0 0
    %242 = vmatprep.subr.bf16.mxu0 0
    %243 = vmatpush2.bf16.msra.mxu0 0
    %244 = vmatprep.subr.bf16.mxu0 0
    %245 = vmatpush2.bf16.msra.mxu0 0
    %246 = vmatprep.subr.bf16.mxu0 0
    %247 = vmatpush2.bf16.msra.mxu0 0
    %248 = vmatprep.subr.bf16.mxu0 0
    %249 = vmatpush2.bf16.msra.mxu0 0
    %250 = vmatprep.subr.bf16.mxu0 0
    %251 = vmatpush2.bf16.msra.mxu0 0
    %252 = vmatprep.subr.bf16.mxu0 0
    %253 = vmatpush2.bf16.msra.mxu0 0
    %254 = vmatprep.mubr.bf16.mxu0 0
    %255 = vmatmul.mubr.bf16.gmra.mxu0 %v220
    %v256 = vpop.f32.mrf.mxu0
    %v257 = vadd.f32 %v192, %v256
    %v258 = vpop.f32.mrf.mxu0
    %v259 = vpop.f32.mrf.mxu0
    %v260 = vadd.f32 %v192, %v259
    %v261 = vpop.f32.mrf.mxu0
    %262 = vdwg.mxu0
    %v263 = vmax.f32 %v257, 0.0
    %v264 = vmax.f32 %v260, 0.0
    %v265 = vpack.c.bf16 %v264, %v263
    %v266 = vld [vmem:[#allocation2] sm:$0xf]
    %v267 = vld [vmem:[#allocation2 + $0x4] sm:$0xf]
    %v268 = vld [vmem:[#allocation2 + $0x8] sm:$0xf]
    %v269 = vld [vmem:[#allocation2 + $0xc] sm:$0xf]
    %v270 = vld [vmem:[#allocation2 + $0x10] sm:$0xf]
    %v271 = vld [vmem:[#allocation2 + $0x14] sm:$0xf]
    %v272 = vld [vmem:[#allocation2 + $0x18] sm:$0xf]
    %v273 = vld [vmem:[#allocation2 + $0x1c] sm:$0xf]
    %v274 = vld [vmem:[#allocation2 + $0x20] sm:$0xf]
    %v275 = vld [vmem:[#allocation2 + $0x24] sm:$0xf]
    %v276 = vld [vmem:[#allocation2 + $0x28] sm:$0xf]
    %v277 = vld [vmem:[#allocation2 + $0x2c] sm:$0xf]
    %v278 = vld [vmem:[#allocation2 + $0x30] sm:$0xf]
    %v279 = vld [vmem:[#allocation2 + $0x34] sm:$0xf]
    %v280 = vld [vmem:[#allocation2 + $0x38] sm:$0xf]
    %v281 = vld [vmem:[#allocation2 + $0x3c] sm:$0xf]
    %v282 = vld [vmem:[#allocation9 + $0x2] sm:$0x1]
    %v284 = vlaneseq
    %v285 = vshrl.u32 %v284, 7
    %v286 = vsub.s32 0, %v285
    %v287 = vrot.slane %v282, %v286
    %v305 = vunpack.c.l.b16 %v266
    %v306 = vunpack.c.l.b16 %v267
    %v307 = vunpack.c.l.b16 %v268
    %v308 = vunpack.c.l.b16 %v269
    %v309 = vunpack.c.l.b16 %v270
    %v310 = vunpack.c.l.b16 %v271
    %v311 = vunpack.c.l.b16 %v272
    %v312 = vunpack.c.l.b16 %v273
    %v313 = vunpack.c.l.b16 %v274
    %v314 = vunpack.c.l.b16 %v275
    %v315 = vunpack.c.l.b16 %v276
    %v316 = vunpack.c.l.b16 %v277
    %v317 = vunpack.c.l.b16 %v278
    %v318 = vunpack.c.l.b16 %v279
    %v319 = vunpack.c.l.b16 %v280
    %v320 = vunpack.c.l.b16 %v281
    %v321 = vpack.c.b16 %v306, %v305
    %v322 = vpack.c.b16 %v308, %v307
    %v323 = vpack.c.b16 %v310, %v309
    %v324 = vpack.c.b16 %v312, %v311
    %v325 = vpack.c.b16 %v314, %v313
    %v326 = vpack.c.b16 %v316, %v315
    %v327 = vpack.c.b16 %v318, %v317
    %v328 = vpack.c.b16 %v320, %v319
    %337 = vmatprep.subr.bf16.mxu0 0
    %338 = vmatpush1.bf16.msra.mxu0 %v328
    %339 = vmatprep.subr.bf16.mxu0 0
    %340 = vmatpush1.bf16.msra.mxu0 %v327
    %341 = vmatprep.subr.bf16.mxu0 0
    %342 = vmatpush1.bf16.msra.mxu0 %v326
    %343 = vmatprep.subr.bf16.mxu0 0
    %344 = vmatpush1.bf16.msra.mxu0 %v325
    %345 = vmatprep.subr.bf16.mxu0 0
    %346 = vmatpush1.bf16.msra.mxu0 %v324
    %347 = vmatprep.subr.bf16.mxu0 0
    %348 = vmatpush1.bf16.msra.mxu0 %v323
    %349 = vmatprep.subr.bf16.mxu0 0
    %350 = vmatpush1.bf16.msra.mxu0 %v322
    %351 = vmatprep.subr.bf16.mxu0 0
    %352 = vmatpush1.bf16.msra.mxu0 %v321
    %353 = vmatprep.subr.bf16.mxu0 0
    %354 = vmatpush2.bf16.msra.mxu0 0
    %355 = vmatprep.subr.bf16.mxu0 0
    %356 = vmatpush2.bf16.msra.mxu0 0
    %357 = vmatprep.subr.bf16.mxu0 0
    %358 = vmatpush2.bf16.msra.mxu0 0
    %359 = vmatprep.subr.bf16.mxu0 0
    %360 = vmatpush2.bf16.msra.mxu0 0
    %361 = vmatprep.subr.bf16.mxu0 0
    %362 = vmatpush2.bf16.msra.mxu0 0
    %363 = vmatprep.subr.bf16.mxu0 0
    %364 = vmatpush2.bf16.msra.mxu0 0
    %365 = vmatprep.subr.bf16.mxu0 0
    %366 = vmatpush2.bf16.msra.mxu0 0
    %367 = vmatprep.subr.bf16.mxu0 0
    %368 = vmatpush2.bf16.msra.mxu0 0
    %369 = vmatprep.mubr.bf16.mxu0 0
    %370 = vmatmul.mubr.bf16.gmra.mxu0 %v265
    %v371 = vpop.f32.mrf.mxu0
    %v372 = vadd.f32 %v287, %v371
    %v373 = vpop.f32.mrf.mxu0
    %v374 = vpop.f32.mrf.mxu0
    %v375 = vadd.f32 %v287, %v374
    %v376 = vpop.f32.mrf.mxu0
    %377 = vdwg.mxu0
    %v378 = vrot.slane %v372, 4
    %v379 = vadd.f32 %v372, %v378
    %v380 = vrot.slane %v379, 2
    %v381 = vadd.f32 %v379, %v380
    %v382 = vrot.slane %v381, 1
    %v383 = vadd.f32 %v381, %v382
    %v384 = vrot.slane %v375, 4
    %v385 = vadd.f32 %v375, %v384
    %v386 = vrot.slane %v385, 2
    %v387 = vadd.f32 %v385, %v386
    %v388 = vrot.slane %v387, 1
    %v389 = vadd.f32 %v387, %v388
    %v390 = vrcp.pop 8.0
    %v391 = vmul.f32 %v383, %v390
    %v392 = vmul.f32 %v389, %v390
    %v393 = vld [vmem:[%s1] sm:$0x3]
    %v394 = vpack.c.bf16 %v393, %v393
    %v395 = vld [vmem:[#allocation4] sm:$0xff]
    %v396 = vld [vmem:[#allocation4 + $0x8] sm:$0xff]
    %v397 = vld [vmem:[#allocation4 + $0x10] sm:$0xff]
    %v398 = vld [vmem:[#allocation4 + $0x18] sm:$0xff]
    %v399 = vld [vmem:[#allocation4 + $0x20] sm:$0xff]
    %v400 = vld [vmem:[#allocation4 + $0x28] sm:$0xff]
    %v401 = vld [vmem:[#allocation4 + $0x30] sm:$0xff]
    %v402 = vld [vmem:[#allocation4 + $0x38] sm:$0xff]
    %v403 = vld [vmem:[#allocation9 + $0x3] sm:$0x3]
    %v405 = vlaneseq
    %v406 = vshrl.u32 %v405, 7
    %v407 = vsub.s32 0, %v406
    %v408 = vrot.slane %v403, %v407
    %v409 = vlaneseq
    %v410 = vshrl.u32 %v409, 7
    %v411 = vsub.s32 1, %v410
    %v412 = vrot.slane %v403, %v411
    %v423 = vunpack.c.l.b16 %v395
    %v424 = vunpack.c.h.b16 %v395
    %v425 = vunpack.c.l.b16 %v396
    %v426 = vunpack.c.h.b16 %v396
    %v427 = vunpack.c.l.b16 %v397
    %v428 = vunpack.c.h.b16 %v397
    %v429 = vunpack.c.l.b16 %v398
    %v430 = vunpack.c.h.b16 %v398
    %v431 = vunpack.c.l.b16 %v399
    %v432 = vunpack.c.h.b16 %v399
    %v433 = vunpack.c.l.b16 %v400
    %v434 = vunpack.c.h.b16 %v400
    %v435 = vunpack.c.l.b16 %v401
    %v436 = vunpack.c.h.b16 %v401
    %v437 = vunpack.c.l.b16 %v402
    %v438 = vunpack.c.h.b16 %v402
    %v439 = vpack.c.b16 %v425, %v423
    %v440 = vpack.c.b16 %v426, %v424
    %v441 = vpack.c.b16 %v429, %v427
    %v442 = vpack.c.b16 %v430, %v428
    %v443 = vpack.c.b16 %v433, %v431
    %v444 = vpack.c.b16 %v434, %v432
    %v445 = vpack.c.b16 %v437, %v435
    %v446 = vpack.c.b16 %v438, %v436
    %v456 = vsel %vm218, %v394, 0
    %458 = vmatprep.subr.bf16.mxu0 0
    %459 = vmatpush1.bf16.msra.mxu0 0
    %460 = vmatprep.subr.bf16.mxu0 0
    %461 = vmatpush1.bf16.msra.mxu0 0
    %462 = vmatprep.subr.bf16.mxu0 0
    %463 = vmatpush1.bf16.msra.mxu0 0
    %464 = vmatprep.subr.bf16.mxu0 0
    %465 = vmatpush1.bf16.msra.mxu0 0
    %466 = vmatprep.subr.bf16.mxu0 %v446
    %467 = vmatpush1.bf16.msra.mxu0 %v445
    %468 = vmatprep.subr.bf16.mxu0 %v444
    %469 = vmatpush1.bf16.msra.mxu0 %v443
    %470 = vmatprep.subr.bf16.mxu0 %v442
    %471 = vmatpush1.bf16.msra.mxu0 %v441
    %472 = vmatprep.subr.bf16.mxu0 %v440
    %473 = vmatpush1.bf16.msra.mxu0 %v439
    %474 = vmatprep.subr.bf16.mxu0 0
    %475 = vmatpush2.bf16.msra.mxu0 0
    %476 = vmatprep.subr.bf16.mxu0 0
    %477 = vmatpush2.bf16.msra.mxu0 0
    %478 = vmatprep.subr.bf16.mxu0 0
    %479 = vmatpush2.bf16.msra.mxu0 0
    %480 = vmatprep.subr.bf16.mxu0 0
    %481 = vmatpush2.bf16.msra.mxu0 0
    %482 = vmatprep.subr.bf16.mxu0 0
    %483 = vmatpush2.bf16.msra.mxu0 0
    %484 = vmatprep.subr.bf16.mxu0 0
    %485 = vmatpush2.bf16.msra.mxu0 0
    %486 = vmatprep.subr.bf16.mxu0 0
    %487 = vmatpush2.bf16.msra.mxu0 0
    %488 = vmatprep.subr.bf16.mxu0 0
    %489 = vmatpush2.bf16.msra.mxu0 0
    %490 = vmatprep.mubr.bf16.mxu0 0
    %491 = vmatmul.mubr.bf16.gmra.mxu0 %v456
    %v492 = vpop.f32.mrf.mxu0
    %v493 = vadd.f32 %v408, %v492
    %v494 = vpop.f32.mrf.mxu0
    %v495 = vadd.f32 %v412, %v494
    %v496 = vpop.f32.mrf.mxu0
    %v497 = vpop.f32.mrf.mxu0
    %498 = vdwg.mxu0
    %v499 = vmax.f32 %v493, 0.0
    %v500 = vmax.f32 %v495, 0.0
    %v501 = vpack.c.bf16 %v499, %v499
    %v502 = vpack.c.bf16 %v500, %v500
    %v503 = vld [vmem:[%s7] sm:$0xff]
    %v504 = vld [vmem:[%s7 + $0x8] sm:$0xff]
    %v505 = vld [vmem:[%s7 + $0x10] sm:$0xff]
    %v506 = vld [vmem:[%s7 + $0x18] sm:$0xff]
    %v507 = vld [vmem:[%s7 + $0x20] sm:$0xff]
    %v508 = vld [vmem:[%s7 + $0x28] sm:$0xff]
    %v509 = vld [vmem:[%s7 + $0x30] sm:$0xff]
    %v510 = vld [vmem:[%s7 + $0x38] sm:$0xff]
    %v511 = vld [vmem:[%s7 + $0x40] sm:$0xff]
    %v512 = vld [vmem:[%s7 + $0x48] sm:$0xff]
    %v513 = vld [vmem:[%s7 + $0x50] sm:$0xff]
    %v514 = vld [vmem:[%s7 + $0x58] sm:$0xff]
    %v515 = vld [vmem:[%s7 + $0x60] sm:$0xff]
    %v516 = vld [vmem:[%s7 + $0x68] sm:$0xff]
    %v517 = vld [vmem:[%s7 + $0x70] sm:$0xff]
    %v518 = vld [vmem:[%s7 + $0x78] sm:$0xff]
    %v519 = vld [vmem:[%s7 + $0x80] sm:$0xff]
    %v520 = vld [vmem:[%s7 + $0x88] sm:$0xff]
    %v521 = vld [vmem:[%s7 + $0x90] sm:$0xff]
    %v522 = vld [vmem:[%s7 + $0x98] sm:$0xff]
    %v523 = vld [vmem:[%s7 + $0xa0] sm:$0xff]
    %v524 = vld [vmem:[%s7 + $0xa8] sm:$0xff]
    %v525 = vld [vmem:[%s7 + $0xb0] sm:$0xff]
    %v526 = vld [vmem:[%s7 + $0xb8] sm:$0xff]
    %v527 = vld [vmem:[%s7 + $0xc0] sm:$0xff]
    %v528 = vld [vmem:[%s7 + $0xc8] sm:$0xff]
    %v529 = vld [vmem:[%s7 + $0xd0] sm:$0xff]
    %v530 = vld [vmem:[%s7 + $0xd8] sm:$0xff]
    %v531 = vld [vmem:[%s7 + $0xe0] sm:$0xff]
    %v532 = vld [vmem:[%s7 + $0xe8] sm:$0xff]
    %v533 = vld [vmem:[%s7 + $0xf0] sm:$0xff]
    %v534 = vld [vmem:[%s7 + $0xf8] sm:$0xff]
    %v535 = vld [vmem:[%s7 + $0x100] sm:$0xff]
    %v536 = vld [vmem:[%s7 + $0x108] sm:$0xff]
    %v537 = vld [vmem:[%s7 + $0x110] sm:$0xff]
    %v538 = vld [vmem:[%s7 + $0x118] sm:$0xff]
    %v539 = vld [vmem:[%s7 + $0x120] sm:$0xff]
    %v540 = vld [vmem:[%s7 + $0x128] sm:$0xff]
    %v541 = vld [vmem:[%s7 + $0x130] sm:$0xff]
    %v542 = vld [vmem:[%s7 + $0x138] sm:$0xff]
    %v543 = vld [vmem:[%s7 + $0x140] sm:$0xff]
    %v544 = vld [vmem:[%s7 + $0x148] sm:$0xff]
    %v545 = vld [vmem:[%s7 + $0x150] sm:$0xff]
    %v546 = vld [vmem:[%s7 + $0x158] sm:$0xff]
    %v547 = vld [vmem:[%s7 + $0x160] sm:$0xff]
    %v548 = vld [vmem:[%s7 + $0x168] sm:$0xff]
    %v549 = vld [vmem:[%s7 + $0x170] sm:$0xff]
    %v550 = vld [vmem:[%s7 + $0x178] sm:$0xff]
    %v551 = vld [vmem:[%s7 + $0x180] sm:$0xff]
    %v552 = vld [vmem:[%s7 + $0x188] sm:$0xff]
    %v553 = vld [vmem:[%s7 + $0x190] sm:$0xff]
    %v554 = vld [vmem:[%s7 + $0x198] sm:$0xff]
    %v555 = vld [vmem:[%s7 + $0x1a0] sm:$0xff]
    %v556 = vld [vmem:[%s7 + $0x1a8] sm:$0xff]
    %v557 = vld [vmem:[%s7 + $0x1b0] sm:$0xff]
    %v558 = vld [vmem:[%s7 + $0x1b8] sm:$0xff]
    %v559 = vld [vmem:[%s7 + $0x1c0] sm:$0xff]
    %v560 = vld [vmem:[%s7 + $0x1c8] sm:$0xff]
    %v561 = vld [vmem:[%s7 + $0x1d0] sm:$0xff]
    %v562 = vld [vmem:[%s7 + $0x1d8] sm:$0xff]
    %v563 = vld [vmem:[%s7 + $0x1e0] sm:$0xff]
    %v564 = vld [vmem:[%s7 + $0x1e8] sm:$0xff]
    %v565 = vld [vmem:[%s7 + $0x1f0] sm:$0xff]
    %v566 = vld [vmem:[%s7 + $0x1f8] sm:$0xff]
    %v567 = vld [vmem:[#allocation9 + $0x5] sm:$0xf]
    %v569 = vlaneseq
    %v570 = vshrl.u32 %v569, 7
    %v571 = vsub.s32 0, %v570
    %v572 = vrot.slane %v567, %v571
    %v573 = vlaneseq
    %v574 = vshrl.u32 %v573, 7
    %v575 = vsub.s32 1, %v574
    %v576 = vrot.slane %v567, %v575
    %v577 = vlaneseq
    %v578 = vshrl.u32 %v577, 7
    %v579 = vsub.s32 2, %v578
    %v580 = vrot.slane %v567, %v579
    %v581 = vlaneseq
    %v582 = vshrl.u32 %v581, 7
    %v583 = vsub.s32 3, %v582
    %v584 = vrot.slane %v567, %v583
    %v653 = vunpack.c.l.b16 %v503
    %v654 = vunpack.c.h.b16 %v503
    %v655 = vunpack.c.l.b16 %v504
    %v656 = vunpack.c.h.b16 %v504
    %v657 = vunpack.c.l.b16 %v505
    %v658 = vunpack.c.h.b16 %v505
    %v659 = vunpack.c.l.b16 %v506
    %v660 = vunpack.c.h.b16 %v506
    %v661 = vunpack.c.l.b16 %v507
    %v662 = vunpack.c.h.b16 %v507
    %v663 = vunpack.c.l.b16 %v508
    %v664 = vunpack.c.h.b16 %v508
    %v665 = vunpack.c.l.b16 %v509
    %v666 = vunpack.c.h.b16 %v509
    %v667 = vunpack.c.l.b16 %v510
    %v668 = vunpack.c.h.b16 %v510
    %v669 = vunpack.c.l.b16 %v511
    %v670 = vunpack.c.h.b16 %v511
    %v671 = vunpack.c.l.b16 %v512
    %v672 = vunpack.c.h.b16 %v512
    %v673 = vunpack.c.l.b16 %v513
    %v674 = vunpack.c.h.b16 %v513
    %v675 = vunpack.c.l.b16 %v514
    %v676 = vunpack.c.h.b16 %v514
    %v677 = vunpack.c.l.b16 %v515
    %v678 = vunpack.c.h.b16 %v515
    %v679 = vunpack.c.l.b16 %v516
    %v680 = vunpack.c.h.b16 %v516
    %v681 = vunpack.c.l.b16 %v517
    %v682 = vunpack.c.h.b16 %v517
    %v683 = vunpack.c.l.b16 %v518
    %v684 = vunpack.c.h.b16 %v518
    %v685 = vunpack.c.l.b16 %v519
    %v686 = vunpack.c.h.b16 %v519
    %v687 = vunpack.c.l.b16 %v520
    %v688 = vunpack.c.h.b16 %v520
    %v689 = vunpack.c.l.b16 %v521
    %v690 = vunpack.c.h.b16 %v521
    %v691 = vunpack.c.l.b16 %v522
    %v692 = vunpack.c.h.b16 %v522
    %v693 = vunpack.c.l.b16 %v523
    %v694 = vunpack.c.h.b16 %v523
    %v695 = vunpack.c.l.b16 %v524
    %v696 = vunpack.c.h.b16 %v524
    %v697 = vunpack.c.l.b16 %v525
    %v698 = vunpack.c.h.b16 %v525
    %v699 = vunpack.c.l.b16 %v526
    %v700 = vunpack.c.h.b16 %v526
    %v701 = vunpack.c.l.b16 %v527
    %v702 = vunpack.c.h.b16 %v527
    %v703 = vunpack.c.l.b16 %v528
    %v704 = vunpack.c.h.b16 %v528
    %v705 = vunpack.c.l.b16 %v529
    %v706 = vunpack.c.h.b16 %v529
    %v707 = vunpack.c.l.b16 %v530
    %v708 = vunpack.c.h.b16 %v530
    %v709 = vunpack.c.l.b16 %v531
    %v710 = vunpack.c.h.b16 %v531
    %v711 = vunpack.c.l.b16 %v532
    %v712 = vunpack.c.h.b16 %v532
    %v713 = vunpack.c.l.b16 %v533
    %v714 = vunpack.c.h.b16 %v533
    %v715 = vunpack.c.l.b16 %v534
    %v716 = vunpack.c.h.b16 %v534
    %v717 = vunpack.c.l.b16 %v535
    %v718 = vunpack.c.h.b16 %v535
    %v719 = vunpack.c.l.b16 %v536
    %v720 = vunpack.c.h.b16 %v536
    %v721 = vunpack.c.l.b16 %v537
    %v722 = vunpack.c.h.b16 %v537
    %v723 = vunpack.c.l.b16 %v538
    %v724 = vunpack.c.h.b16 %v538
    %v725 = vunpack.c.l.b16 %v539
    %v726 = vunpack.c.h.b16 %v539
    %v727 = vunpack.c.l.b16 %v540
    %v728 = vunpack.c.h.b16 %v540
    %v729 = vunpack.c.l.b16 %v541
    %v730 = vunpack.c.h.b16 %v541
    %v731 = vunpack.c.l.b16 %v542
    %v732 = vunpack.c.h.b16 %v542
    %v733 = vunpack.c.l.b16 %v543
    %v734 = vunpack.c.h.b16 %v543
    %v735 = vunpack.c.l.b16 %v544
    %v736 = vunpack.c.h.b16 %v544
    %v737 = vunpack.c.l.b16 %v545
    %v738 = vunpack.c.h.b16 %v545
    %v739 = vunpack.c.l.b16 %v546
    %v740 = vunpack.c.h.b16 %v546
    %v741 = vunpack.c.l.b16 %v547
    %v742 = vunpack.c.h.b16 %v547
    %v743 = vunpack.c.l.b16 %v548
    %v744 = vunpack.c.h.b16 %v548
    %v745 = vunpack.c.l.b16 %v549
    %v746 = vunpack.c.h.b16 %v549
    %v747 = vunpack.c.l.b16 %v550
    %v748 = vunpack.c.h.b16 %v550
    %v749 = vunpack.c.l.b16 %v551
    %v750 = vunpack.c.h.b16 %v551
    %v751 = vunpack.c.l.b16 %v552
    %v752 = vunpack.c.h.b16 %v552
    %v753 = vunpack.c.l.b16 %v553
    %v754 = vunpack.c.h.b16 %v553
    %v755 = vunpack.c.l.b16 %v554
    %v756 = vunpack.c.h.b16 %v554
    %v757 = vunpack.c.l.b16 %v555
    %v758 = vunpack.c.h.b16 %v555
    %v759 = vunpack.c.l.b16 %v556
    %v760 = vunpack.c.h.b16 %v556
    %v761 = vunpack.c.l.b16 %v557
    %v762 = vunpack.c.h.b16 %v557
    %v763 = vunpack.c.l.b16 %v558
    %v764 = vunpack.c.h.b16 %v558
    %v765 = vunpack.c.l.b16 %v559
    %v766 = vunpack.c.h.b16 %v559
    %v767 = vunpack.c.l.b16 %v560
    %v768 = vunpack.c.h.b16 %v560
    %v769 = vunpack.c.l.b16 %v561
    %v770 = vunpack.c.h.b16 %v561
    %v771 = vunpack.c.l.b16 %v562
    %v772 = vunpack.c.h.b16 %v562
    %v773 = vunpack.c.l.b16 %v563
    %v774 = vunpack.c.h.b16 %v563
    %v775 = vunpack.c.l.b16 %v564
    %v776 = vunpack.c.h.b16 %v564
    %v777 = vunpack.c.l.b16 %v565
    %v778 = vunpack.c.h.b16 %v565
    %v779 = vunpack.c.l.b16 %v566
    %v780 = vunpack.c.h.b16 %v566
    %v781 = vpack.c.b16 %v657, %v653
    %v782 = vpack.c.b16 %v658, %v654
    %v783 = vpack.c.b16 %v659, %v655
    %v784 = vpack.c.b16 %v660, %v656
    %v785 = vpack.c.b16 %v665, %v661
    %v786 = vpack.c.b16 %v666, %v662
    %v787 = vpack.c.b16 %v667, %v663
    %v788 = vpack.c.b16 %v668, %v664
    %v789 = vpack.c.b16 %v673, %v669
    %v790 = vpack.c.b16 %v674, %v670
    %v791 = vpack.c.b16 %v675, %v671
    %v792 = vpack.c.b16 %v676, %v672
    %v793 = vpack.c.b16 %v681, %v677
    %v794 = vpack.c.b16 %v682, %v678
    %v795 = vpack.c.b16 %v683, %v679
    %v796 = vpack.c.b16 %v684, %v680
    %v797 = vpack.c.b16 %v689, %v685
    %v798 = vpack.c.b16 %v690, %v686
    %v799 = vpack.c.b16 %v691, %v687
    %v800 = vpack.c.b16 %v692, %v688
    %v801 = vpack.c.b16 %v697, %v693
    %v802 = vpack.c.b16 %v698, %v694
    %v803 = vpack.c.b16 %v699, %v695
    %v804 = vpack.c.b16 %v700, %v696
    %v805 = vpack.c.b16 %v705, %v701
    %v806 = vpack.c.b16 %v706, %v702
    %v807 = vpack.c.b16 %v707, %v703
    %v808 = vpack.c.b16 %v708, %v704
    %v809 = vpack.c.b16 %v713, %v709
    %v810 = vpack.c.b16 %v714, %v710
    %v811 = vpack.c.b16 %v715, %v711
    %v812 = vpack.c.b16 %v716, %v712
    %v813 = vpack.c.b16 %v721, %v717
    %v814 = vpack.c.b16 %v722, %v718
    %v815 = vpack.c.b16 %v723, %v719
    %v816 = vpack.c.b16 %v724, %v720
    %v817 = vpack.c.b16 %v729, %v725
    %v818 = vpack.c.b16 %v730, %v726
    %v819 = vpack.c.b16 %v731, %v727
    %v820 = vpack.c.b16 %v732, %v728
    %v821 = vpack.c.b16 %v737, %v733
    %v822 = vpack.c.b16 %v738, %v734
    %v823 = vpack.c.b16 %v739, %v735
    %v824 = vpack.c.b16 %v740, %v736
    %v825 = vpack.c.b16 %v745, %v741
    %v826 = vpack.c.b16 %v746, %v742
    %v827 = vpack.c.b16 %v747, %v743
    %v828 = vpack.c.b16 %v748, %v744
    %v829 = vpack.c.b16 %v753, %v749
    %v830 = vpack.c.b16 %v754, %v750
    %v831 = vpack.c.b16 %v755, %v751
    %v832 = vpack.c.b16 %v756, %v752
    %v833 = vpack.c.b16 %v761, %v757
    %v834 = vpack.c.b16 %v762, %v758
    %v835 = vpack.c.b16 %v763, %v759
    %v836 = vpack.c.b16 %v764, %v760
    %v837 = vpack.c.b16 %v769, %v765
    %v838 = vpack.c.b16 %v770, %v766
    %v839 = vpack.c.b16 %v771, %v767
    %v840 = vpack.c.b16 %v772, %v768
    %v841 = vpack.c.b16 %v777, %v773
    %v842 = vpack.c.b16 %v778, %v774
    %v843 = vpack.c.b16 %v779, %v775
    %v844 = vpack.c.b16 %v780, %v776
    %909 = vmatprep.subr.bf16.mxu0 %v810
    %910 = vmatpush1.bf16.msra.mxu0 %v809
    %911 = vmatprep.subr.bf16.mxu0 %v806
    %912 = vmatpush1.bf16.msra.mxu0 %v805
    %913 = vmatprep.subr.bf16.mxu0 %v802
    %914 = vmatpush1.bf16.msra.mxu0 %v801
    %915 = vmatprep.subr.bf16.mxu0 %v798
    %916 = vmatpush1.bf16.msra.mxu0 %v797
    %917 = vmatprep.subr.bf16.mxu0 %v794
    %918 = vmatpush1.bf16.msra.mxu0 %v793
    %919 = vmatprep.subr.bf16.mxu0 %v790
    %920 = vmatpush1.bf16.msra.mxu0 %v789
    %921 = vmatprep.subr.bf16.mxu0 %v786
    %922 = vmatpush1.bf16.msra.mxu0 %v785
    %923 = vmatprep.subr.bf16.mxu0 %v782
    %924 = vmatpush1.bf16.msra.mxu0 %v781
    %925 = vmatprep.subr.bf16.mxu0 %v842
    %926 = vmatpush2.bf16.msra.mxu0 %v841
    %927 = vmatprep.subr.bf16.mxu0 %v838
    %928 = vmatpush2.bf16.msra.mxu0 %v837
    %929 = vmatprep.subr.bf16.mxu0 %v834
    %930 = vmatpush2.bf16.msra.mxu0 %v833
    %931 = vmatprep.subr.bf16.mxu0 %v830
    %932 = vmatpush2.bf16.msra.mxu0 %v829
    %933 = vmatprep.subr.bf16.mxu0 %v826
    %934 = vmatpush2.bf16.msra.mxu0 %v825
    %935 = vmatprep.subr.bf16.mxu0 %v822
    %936 = vmatpush2.bf16.msra.mxu0 %v821
    %937 = vmatprep.subr.bf16.mxu0 %v818
    %938 = vmatpush2.bf16.msra.mxu0 %v817
    %939 = vmatprep.subr.bf16.mxu0 %v814
    %940 = vmatpush2.bf16.msra.mxu0 %v813
    %941 = vmatprep.mubr.bf16.mxu0 %v502
    %942 = vmatmul.mubr.bf16.gmra.mxu0 %v501
    %v943 = vpop.f32.mrf.mxu0
    %v944 = vadd.f32 %v572, %v943
    %v945 = vpop.f32.mrf.mxu0
    %v946 = vadd.f32 %v576, %v945
    %v947 = vpop.f32.mrf.mxu0
    %v948 = vpop.f32.mrf.mxu0
    %949 = vdwg.mxu0
    %950 = vmatprep.subr.bf16.mxu0 %v812
    %951 = vmatpush1.bf16.msra.mxu0 %v811
    %952 = vmatprep.subr.bf16.mxu0 %v808
    %953 = vmatpush1.bf16.msra.mxu0 %v807
    %954 = vmatprep.subr.bf16.mxu0 %v804
    %955 = vmatpush1.bf16.msra.mxu0 %v803
    %956 = vmatprep.subr.bf16.mxu0 %v800
    %957 = vmatpush1.bf16.msra.mxu0 %v799
    %958 = vmatprep.subr.bf16.mxu0 %v796
    %959 = vmatpush1.bf16.msra.mxu0 %v795
    %960 = vmatprep.subr.bf16.mxu0 %v792
    %961 = vmatpush1.bf16.msra.mxu0 %v791
    %962 = vmatprep.subr.bf16.mxu0 %v788
    %963 = vmatpush1.bf16.msra.mxu0 %v787
    %964 = vmatprep.subr.bf16.mxu0 %v784
    %965 = vmatpush1.bf16.msra.mxu0 %v783
    %966 = vmatprep.subr.bf16.mxu0 %v844
    %967 = vmatpush2.bf16.msra.mxu0 %v843
    %968 = vmatprep.subr.bf16.mxu0 %v840
    %969 = vmatpush2.bf16.msra.mxu0 %v839
    %970 = vmatprep.subr.bf16.mxu0 %v836
    %971 = vmatpush2.bf16.msra.mxu0 %v835
    %972 = vmatprep.subr.bf16.mxu0 %v832
    %973 = vmatpush2.bf16.msra.mxu0 %v831
    %974 = vmatprep.subr.bf16.mxu0 %v828
    %975 = vmatpush2.bf16.msra.mxu0 %v827
    %976 = vmatprep.subr.bf16.mxu0 %v824
    %977 = vmatpush2.bf16.msra.mxu0 %v823
    %978 = vmatprep.subr.bf16.mxu0 %v820
    %979 = vmatpush2.bf16.msra.mxu0 %v819
    %980 = vmatprep.subr.bf16.mxu0 %v816
    %981 = vmatpush2.bf16.msra.mxu0 %v815
    %982 = vmatprep.mubr.bf16.mxu0 %v502
    %983 = vmatmul.mubr.bf16.gmra.mxu0 %v501
    %v984 = vpop.f32.mrf.mxu0
    %v985 = vadd.f32 %v580, %v984
    %v986 = vpop.f32.mrf.mxu0
    %v987 = vadd.f32 %v584, %v986
    %v988 = vpop.f32.mrf.mxu0
    %v989 = vpop.f32.mrf.mxu0
    %990 = vdwg.mxu0
    %v991 = vmax.f32 %v944, 0.0
    %v992 = vmax.f32 %v946, 0.0
    %v993 = vmax.f32 %v985, 0.0
    %v994 = vmax.f32 %v987, 0.0
    %v995 = vpack.c.bf16 %v991, %v991
    %v996 = vpack.c.bf16 %v992, %v992
    %v997 = vpack.c.bf16 %v993, %v993
    %v998 = vpack.c.bf16 %v994, %v994
    %v999 = vld [vmem:[%s8] sm:$0xf]
    %v1000 = vld [vmem:[%s8 + $0x4] sm:$0xf]
    %v1001 = vld [vmem:[%s8 + $0x8] sm:$0xf]
    %v1002 = vld [vmem:[%s8 + $0xc] sm:$0xf]
    %v1003 = vld [vmem:[%s8 + $0x10] sm:$0xf]
    %v1004 = vld [vmem:[%s8 + $0x14] sm:$0xf]
    %v1005 = vld [vmem:[%s8 + $0x18] sm:$0xf]
    %v1006 = vld [vmem:[%s8 + $0x1c] sm:$0xf]
    %v1007 = vld [vmem:[%s8 + $0x20] sm:$0xf]
    %v1008 = vld [vmem:[%s8 + $0x24] sm:$0xf]
    %v1009 = vld [vmem:[%s8 + $0x28] sm:$0xf]
    %v1010 = vld [vmem:[%s8 + $0x2c] sm:$0xf]
    %v1011 = vld [vmem:[%s8 + $0x30] sm:$0xf]
    %v1012 = vld [vmem:[%s8 + $0x34] sm:$0xf]
    %v1013 = vld [vmem:[%s8 + $0x38] sm:$0xf]
    %v1014 = vld [vmem:[%s8 + $0x3c] sm:$0xf]
    %v1015 = vld [vmem:[%s8 + $0x40] sm:$0xf]
    %v1016 = vld [vmem:[%s8 + $0x44] sm:$0xf]
    %v1017 = vld [vmem:[%s8 + $0x48] sm:$0xf]
    %v1018 = vld [vmem:[%s8 + $0x4c] sm:$0xf]
    %v1019 = vld [vmem:[%s8 + $0x50] sm:$0xf]
    %v1020 = vld [vmem:[%s8 + $0x54] sm:$0xf]
    %v1021 = vld [vmem:[%s8 + $0x58] sm:$0xf]
    %v1022 = vld [vmem:[%s8 + $0x5c] sm:$0xf]
    %v1023 = vld [vmem:[%s8 + $0x60] sm:$0xf]
    %v1024 = vld [vmem:[%s8 + $0x64] sm:$0xf]
    %v1025 = vld [vmem:[%s8 + $0x68] sm:$0xf]
    %v1026 = vld [vmem:[%s8 + $0x6c] sm:$0xf]
    %v1027 = vld [vmem:[%s8 + $0x70] sm:$0xf]
    %v1028 = vld [vmem:[%s8 + $0x74] sm:$0xf]
    %v1029 = vld [vmem:[%s8 + $0x78] sm:$0xf]
    %v1030 = vld [vmem:[%s8 + $0x7c] sm:$0xf]
    %v1031 = vld [vmem:[%s8 + $0x80] sm:$0xf]
    %v1032 = vld [vmem:[%s8 + $0x84] sm:$0xf]
    %v1033 = vld [vmem:[%s8 + $0x88] sm:$0xf]
    %v1034 = vld [vmem:[%s8 + $0x8c] sm:$0xf]
    %v1035 = vld [vmem:[%s8 + $0x90] sm:$0xf]
    %v1036 = vld [vmem:[%s8 + $0x94] sm:$0xf]
    %v1037 = vld [vmem:[%s8 + $0x98] sm:$0xf]
    %v1038 = vld [vmem:[%s8 + $0x9c] sm:$0xf]
    %v1039 = vld [vmem:[%s8 + $0xa0] sm:$0xf]
    %v1040 = vld [vmem:[%s8 + $0xa4] sm:$0xf]
    %v1041 = vld [vmem:[%s8 + $0xa8] sm:$0xf]
    %v1042 = vld [vmem:[%s8 + $0xac] sm:$0xf]
    %v1043 = vld [vmem:[%s8 + $0xb0] sm:$0xf]
    %v1044 = vld [vmem:[%s8 + $0xb4] sm:$0xf]
    %v1045 = vld [vmem:[%s8 + $0xb8] sm:$0xf]
    %v1046 = vld [vmem:[%s8 + $0xbc] sm:$0xf]
    %v1047 = vld [vmem:[%s8 + $0xc0] sm:$0xf]
    %v1048 = vld [vmem:[%s8 + $0xc4] sm:$0xf]
    %v1049 = vld [vmem:[%s8 + $0xc8] sm:$0xf]
    %v1050 = vld [vmem:[%s8 + $0xcc] sm:$0xf]
    %v1051 = vld [vmem:[%s8 + $0xd0] sm:$0xf]
    %v1052 = vld [vmem:[%s8 + $0xd4] sm:$0xf]
    %v1053 = vld [vmem:[%s8 + $0xd8] sm:$0xf]
    %v1054 = vld [vmem:[%s8 + $0xdc] sm:$0xf]
    %v1055 = vld [vmem:[%s8 + $0xe0] sm:$0xf]
    %v1056 = vld [vmem:[%s8 + $0xe4] sm:$0xf]
    %v1057 = vld [vmem:[%s8 + $0xe8] sm:$0xf]
    %v1058 = vld [vmem:[%s8 + $0xec] sm:$0xf]
    %v1059 = vld [vmem:[%s8 + $0xf0] sm:$0xf]
    %v1060 = vld [vmem:[%s8 + $0xf4] sm:$0xf]
    %v1061 = vld [vmem:[%s8 + $0xf8] sm:$0xf]
    %v1062 = vld [vmem:[%s8 + $0xfc] sm:$0xf]
    %v1063 = vld [vmem:[#allocation9 + $0x9] sm:$0x1]
    %v1065 = vlaneseq
    %v1066 = vshrl.u32 %v1065, 7
    %v1067 = vsub.s32 0, %v1066
    %v1068 = vrot.slane %v1063, %v1067
    %v1134 = vunpack.c.l.b16 %v999
    %v1135 = vunpack.c.l.b16 %v1000
    %v1136 = vunpack.c.l.b16 %v1001
    %v1137 = vunpack.c.l.b16 %v1002
    %v1138 = vunpack.c.l.b16 %v1003
    %v1139 = vunpack.c.l.b16 %v1004
    %v1140 = vunpack.c.l.b16 %v1005
    %v1141 = vunpack.c.l.b16 %v1006
    %v1142 = vunpack.c.l.b16 %v1007
    %v1143 = vunpack.c.l.b16 %v1008
    %v1144 = vunpack.c.l.b16 %v1009
    %v1145 = vunpack.c.l.b16 %v1010
    %v1146 = vunpack.c.l.b16 %v1011
    %v1147 = vunpack.c.l.b16 %v1012
    %v1148 = vunpack.c.l.b16 %v1013
    %v1149 = vunpack.c.l.b16 %v1014
    %v1150 = vunpack.c.l.b16 %v1015
    %v1151 = vunpack.c.l.b16 %v1016
    %v1152 = vunpack.c.l.b16 %v1017
    %v1153 = vunpack.c.l.b16 %v1018
    %v1154 = vunpack.c.l.b16 %v1019
    %v1155 = vunpack.c.l.b16 %v1020
    %v1156 = vunpack.c.l.b16 %v1021
    %v1157 = vunpack.c.l.b16 %v1022
    %v1158 = vunpack.c.l.b16 %v1023
    %v1159 = vunpack.c.l.b16 %v1024
    %v1160 = vunpack.c.l.b16 %v1025
    %v1161 = vunpack.c.l.b16 %v1026
    %v1162 = vunpack.c.l.b16 %v1027
    %v1163 = vunpack.c.l.b16 %v1028
    %v1164 = vunpack.c.l.b16 %v1029
    %v1165 = vunpack.c.l.b16 %v1030
    %v1166 = vunpack.c.l.b16 %v1031
    %v1167 = vunpack.c.l.b16 %v1032
    %v1168 = vunpack.c.l.b16 %v1033
    %v1169 = vunpack.c.l.b16 %v1034
    %v1170 = vunpack.c.l.b16 %v1035
    %v1171 = vunpack.c.l.b16 %v1036
    %v1172 = vunpack.c.l.b16 %v1037
    %v1173 = vunpack.c.l.b16 %v1038
    %v1174 = vunpack.c.l.b16 %v1039
    %v1175 = vunpack.c.l.b16 %v1040
    %v1176 = vunpack.c.l.b16 %v1041
    %v1177 = vunpack.c.l.b16 %v1042
    %v1178 = vunpack.c.l.b16 %v1043
    %v1179 = vunpack.c.l.b16 %v1044
    %v1180 = vunpack.c.l.b16 %v1045
    %v1181 = vunpack.c.l.b16 %v1046
    %v1182 = vunpack.c.l.b16 %v1047
    %v1183 = vunpack.c.l.b16 %v1048
    %v1184 = vunpack.c.l.b16 %v1049
    %v1185 = vunpack.c.l.b16 %v1050
    %v1186 = vunpack.c.l.b16 %v1051
    %v1187 = vunpack.c.l.b16 %v1052
    %v1188 = vunpack.c.l.b16 %v1053
    %v1189 = vunpack.c.l.b16 %v1054
    %v1190 = vunpack.c.l.b16 %v1055
    %v1191 = vunpack.c.l.b16 %v1056
    %v1192 = vunpack.c.l.b16 %v1057
    %v1193 = vunpack.c.l.b16 %v1058
    %v1194 = vunpack.c.l.b16 %v1059
    %v1195 = vunpack.c.l.b16 %v1060
    %v1196 = vunpack.c.l.b16 %v1061
    %v1197 = vunpack.c.l.b16 %v1062
    %v1198 = vpack.c.b16 %v1135, %v1134
    %v1199 = vpack.c.b16 %v1137, %v1136
    %v1200 = vpack.c.b16 %v1139, %v1138
    %v1201 = vpack.c.b16 %v1141, %v1140
    %v1202 = vpack.c.b16 %v1143, %v1142
    %v1203 = vpack.c.b16 %v1145, %v1144
    %v1204 = vpack.c.b16 %v1147, %v1146
    %v1205 = vpack.c.b16 %v1149, %v1148
    %v1206 = vpack.c.b16 %v1151, %v1150
    %v1207 = vpack.c.b16 %v1153, %v1152
    %v1208 = vpack.c.b16 %v1155, %v1154
    %v1209 = vpack.c.b16 %v1157, %v1156
    %v1210 = vpack.c.b16 %v1159, %v1158
    %v1211 = vpack.c.b16 %v1161, %v1160
    %v1212 = vpack.c.b16 %v1163, %v1162
    %v1213 = vpack.c.b16 %v1165, %v1164
    %v1214 = vpack.c.b16 %v1167, %v1166
    %v1215 = vpack.c.b16 %v1169, %v1168
    %v1216 = vpack.c.b16 %v1171, %v1170
    %v1217 = vpack.c.b16 %v1173, %v1172
    %v1218 = vpack.c.b16 %v1175, %v1174
    %v1219 = vpack.c.b16 %v1177, %v1176
    %v1220 = vpack.c.b16 %v1179, %v1178
    %v1221 = vpack.c.b16 %v1181, %v1180
    %v1222 = vpack.c.b16 %v1183, %v1182
    %v1223 = vpack.c.b16 %v1185, %v1184
    %v1224 = vpack.c.b16 %v1187, %v1186
    %v1225 = vpack.c.b16 %v1189, %v1188
    %v1226 = vpack.c.b16 %v1191, %v1190
    %v1227 = vpack.c.b16 %v1193, %v1192
    %v1228 = vpack.c.b16 %v1195, %v1194
    %v1229 = vpack.c.b16 %v1197, %v1196
    %1262 = vmatprep.subr.bf16.mxu0 0
    %1263 = vmatpush1.bf16.msra.mxu0 %v1205
    %1264 = vmatprep.subr.bf16.mxu0 0
    %1265 = vmatpush1.bf16.msra.mxu0 %v1204
    %1266 = vmatprep.subr.bf16.mxu0 0
    %1267 = vmatpush1.bf16.msra.mxu0 %v1203
    %1268 = vmatprep.subr.bf16.mxu0 0
    %1269 = vmatpush1.bf16.msra.mxu0 %v1202
    %1270 = vmatprep.subr.bf16.mxu0 0
    %1271 = vmatpush1.bf16.msra.mxu0 %v1201
    %1272 = vmatprep.subr.bf16.mxu0 0
    %1273 = vmatpush1.bf16.msra.mxu0 %v1200
    %1274 = vmatprep.subr.bf16.mxu0 0
    %1275 = vmatpush1.bf16.msra.mxu0 %v1199
    %1276 = vmatprep.subr.bf16.mxu0 0
    %1277 = vmatpush1.bf16.msra.mxu0 %v1198
    %1278 = vmatprep.subr.bf16.mxu0 0
    %1279 = vmatpush2.bf16.msra.mxu0 %v1213
    %1280 = vmatprep.subr.bf16.mxu0 0
    %1281 = vmatpush2.bf16.msra.mxu0 %v1212
    %1282 = vmatprep.subr.bf16.mxu0 0
    %1283 = vmatpush2.bf16.msra.mxu0 %v1211
    %1284 = vmatprep.subr.bf16.mxu0 0
    %1285 = vmatpush2.bf16.msra.mxu0 %v1210
    %1286 = vmatprep.subr.bf16.mxu0 0
    %1287 = vmatpush2.bf16.msra.mxu0 %v1209
    %1288 = vmatprep.subr.bf16.mxu0 0
    %1289 = vmatpush2.bf16.msra.mxu0 %v1208
    %1290 = vmatprep.subr.bf16.mxu0 0
    %1291 = vmatpush2.bf16.msra.mxu0 %v1207
    %1292 = vmatprep.subr.bf16.mxu0 0
    %1293 = vmatpush2.bf16.msra.mxu0 %v1206
    %1294 = vmatprep.mubr.bf16.mxu0 %v996
    %1295 = vmatmul.mubr.bf16.gmra.mxu0 %v995
    %v1296 = vpop.f32.mrf.mxu0
    %v1297 = vadd.f32 %v1068, %v1296
    %v1298 = vpop.f32.mrf.mxu0
    %v1299 = vpop.f32.mrf.mxu0
    %v1300 = vpop.f32.mrf.mxu0
    %1301 = vdwg.mxu0
    %1302 = vmatprep.subr.bf16.mxu0 0
    %1303 = vmatpush1.bf16.msra.mxu0 %v1221
    %1304 = vmatprep.subr.bf16.mxu0 0
    %1305 = vmatpush1.bf16.msra.mxu0 %v1220
    %1306 = vmatprep.subr.bf16.mxu0 0
    %1307 = vmatpush1.bf16.msra.mxu0 %v1219
    %1308 = vmatprep.subr.bf16.mxu0 0
    %1309 = vmatpush1.bf16.msra.mxu0 %v1218
    %1310 = vmatprep.subr.bf16.mxu0 0
    %1311 = vmatpush1.bf16.msra.mxu0 %v1217
    %1312 = vmatprep.subr.bf16.mxu0 0
    %1313 = vmatpush1.bf16.msra.mxu0 %v1216
    %1314 = vmatprep.subr.bf16.mxu0 0
    %1315 = vmatpush1.bf16.msra.mxu0 %v1215
    %1316 = vmatprep.subr.bf16.mxu0 0
    %1317 = vmatpush1.bf16.msra.mxu0 %v1214
    %1318 = vmatprep.subr.bf16.mxu0 0
    %1319 = vmatpush2.bf16.msra.mxu0 %v1229
    %1320 = vmatprep.subr.bf16.mxu0 0
    %1321 = vmatpush2.bf16.msra.mxu0 %v1228
    %1322 = vmatprep.subr.bf16.mxu0 0
    %1323 = vmatpush2.bf16.msra.mxu0 %v1227
    %1324 = vmatprep.subr.bf16.mxu0 0
    %1325 = vmatpush2.bf16.msra.mxu0 %v1226
    %1326 = vmatprep.subr.bf16.mxu0 0
    %1327 = vmatpush2.bf16.msra.mxu0 %v1225
    %1328 = vmatprep.subr.bf16.mxu0 0
    %1329 = vmatpush2.bf16.msra.mxu0 %v1224
    %1330 = vmatprep.subr.bf16.mxu0 0
    %1331 = vmatpush2.bf16.msra.mxu0 %v1223
    %1332 = vmatprep.subr.bf16.mxu0 0
    %1333 = vmatpush2.bf16.msra.mxu0 %v1222
    %1334 = vmatprep.mubr.bf16.mxu0 %v998
    %1335 = vmatmul.mubr.bf16.gmra.mxu0 %v997
    %v1336 = vpop.f32.mrf.mxu0
    %v1337 = vadd.f32 %v1297, %v1336
    %v1338 = vpop.f32.mrf.mxu0
    %v1339 = vpop.f32.mrf.mxu0
    %v1340 = vpop.f32.mrf.mxu0
    %1341 = vdwg.mxu0
    %v1342 = vld [vmem:[%s2] sm:$0x3]
    %v1343 = vpack.c.bf16 %v1342, %v1342
    %v1344 = vld [vmem:[#allocation6] sm:$0xff]
    %v1345 = vld [vmem:[#allocation6 + $0x8] sm:$0xff]
    %v1346 = vld [vmem:[#allocation6 + $0x10] sm:$0xff]
    %v1347 = vld [vmem:[#allocation6 + $0x18] sm:$0xff]
    %v1348 = vld [vmem:[#allocation6 + $0x20] sm:$0xff]
    %v1349 = vld [vmem:[#allocation6 + $0x28] sm:$0xff]
    %v1350 = vld [vmem:[#allocation6 + $0x30] sm:$0xff]
    %v1351 = vld [vmem:[#allocation6 + $0x38] sm:$0xff]
    %v1352 = vld [vmem:[#allocation6 + $0x40] sm:$0xff]
    %v1353 = vld [vmem:[#allocation6 + $0x48] sm:$0xff]
    %v1354 = vld [vmem:[#allocation6 + $0x50] sm:$0xff]
    %v1355 = vld [vmem:[#allocation6 + $0x58] sm:$0xff]
    %v1356 = vld [vmem:[#allocation6 + $0x60] sm:$0xff]
    %v1357 = vld [vmem:[#allocation6 + $0x68] sm:$0xff]
    %v1358 = vld [vmem:[#allocation6 + $0x70] sm:$0xff]
    %v1359 = vld [vmem:[#allocation6 + $0x78] sm:$0xff]
    %v1360 = vld [vmem:[#allocation9 + $0xa] sm:$0x3]
    %v1362 = vlaneseq
    %v1363 = vshrl.u32 %v1362, 7
    %v1364 = vsub.s32 0, %v1363
    %v1365 = vrot.slane %v1360, %v1364
    %v1366 = vlaneseq
    %v1367 = vshrl.u32 %v1366, 7
    %v1368 = vsub.s32 1, %v1367
    %v1369 = vrot.slane %v1360, %v1368
    %v1388 = vunpack.c.l.b16 %v1344
    %v1389 = vunpack.c.h.b16 %v1344
    %v1390 = vunpack.c.l.b16 %v1345
    %v1391 = vunpack.c.h.b16 %v1345
    %v1392 = vunpack.c.l.b16 %v1346
    %v1393 = vunpack.c.h.b16 %v1346
    %v1394 = vunpack.c.l.b16 %v1347
    %v1395 = vunpack.c.h.b16 %v1347
    %v1396 = vunpack.c.l.b16 %v1348
    %v1397 = vunpack.c.h.b16 %v1348
    %v1398 = vunpack.c.l.b16 %v1349
    %v1399 = vunpack.c.h.b16 %v1349
    %v1400 = vunpack.c.l.b16 %v1350
    %v1401 = vunpack.c.h.b16 %v1350
    %v1402 = vunpack.c.l.b16 %v1351
    %v1403 = vunpack.c.h.b16 %v1351
    %v1404 = vunpack.c.l.b16 %v1352
    %v1405 = vunpack.c.h.b16 %v1352
    %v1406 = vunpack.c.l.b16 %v1353
    %v1407 = vunpack.c.h.b16 %v1353
    %v1408 = vunpack.c.l.b16 %v1354
    %v1409 = vunpack.c.h.b16 %v1354
    %v1410 = vunpack.c.l.b16 %v1355
    %v1411 = vunpack.c.h.b16 %v1355
    %v1412 = vunpack.c.l.b16 %v1356
    %v1413 = vunpack.c.h.b16 %v1356
    %v1414 = vunpack.c.l.b16 %v1357
    %v1415 = vunpack.c.h.b16 %v1357
    %v1416 = vunpack.c.l.b16 %v1358
    %v1417 = vunpack.c.h.b16 %v1358
    %v1418 = vunpack.c.l.b16 %v1359
    %v1419 = vunpack.c.h.b16 %v1359
    %v1420 = vpack.c.b16 %v1390, %v1388
    %v1421 = vpack.c.b16 %v1391, %v1389
    %v1422 = vpack.c.b16 %v1394, %v1392
    %v1423 = vpack.c.b16 %v1395, %v1393
    %v1424 = vpack.c.b16 %v1398, %v1396
    %v1425 = vpack.c.b16 %v1399, %v1397
    %v1426 = vpack.c.b16 %v1402, %v1400
    %v1427 = vpack.c.b16 %v1403, %v1401
    %v1428 = vpack.c.b16 %v1406, %v1404
    %v1429 = vpack.c.b16 %v1407, %v1405
    %v1430 = vpack.c.b16 %v1410, %v1408
    %v1431 = vpack.c.b16 %v1411, %v1409
    %v1432 = vpack.c.b16 %v1414, %v1412
    %v1433 = vpack.c.b16 %v1415, %v1413
    %v1434 = vpack.c.b16 %v1418, %v1416
    %v1435 = vpack.c.b16 %v1419, %v1417
    %1452 = vmatprep.subr.bf16.mxu0 %v1435
    %1453 = vmatpush1.bf16.msra.mxu0 %v1434
    %1454 = vmatprep.subr.bf16.mxu0 %v1433
    %1455 = vmatpush1.bf16.msra.mxu0 %v1432
    %1456 = vmatprep.subr.bf16.mxu0 %v1431
    %1457 = vmatpush1.bf16.msra.mxu0 %v1430
    %1458 = vmatprep.subr.bf16.mxu0 %v1429
    %1459 = vmatpush1.bf16.msra.mxu0 %v1428
    %1460 = vmatprep.subr.bf16.mxu0 %v1427
    %1461 = vmatpush1.bf16.msra.mxu0 %v1426
    %1462 = vmatprep.subr.bf16.mxu0 %v1425
    %1463 = vmatpush1.bf16.msra.mxu0 %v1424
    %1464 = vmatprep.subr.bf16.mxu0 %v1423
    %1465 = vmatpush1.bf16.msra.mxu0 %v1422
    %1466 = vmatprep.subr.bf16.mxu0 %v1421
    %1467 = vmatpush1.bf16.msra.mxu0 %v1420
    %1468 = vmatprep.subr.bf16.mxu0 0
    %1469 = vmatpush2.bf16.msra.mxu0 0
    %1470 = vmatprep.subr.bf16.mxu0 0
    %1471 = vmatpush2.bf16.msra.mxu0 0
    %1472 = vmatprep.subr.bf16.mxu0 0
    %1473 = vmatpush2.bf16.msra.mxu0 0
    %1474 = vmatprep.subr.bf16.mxu0 0
    %1475 = vmatpush2.bf16.msra.mxu0 0
    %1476 = vmatprep.subr.bf16.mxu0 0
    %1477 = vmatpush2.bf16.msra.mxu0 0
    %1478 = vmatprep.subr.bf16.mxu0 0
    %1479 = vmatpush2.bf16.msra.mxu0 0
    %1480 = vmatprep.subr.bf16.mxu0 0
    %1481 = vmatpush2.bf16.msra.mxu0 0
    %1482 = vmatprep.subr.bf16.mxu0 0
    %1483 = vmatpush2.bf16.msra.mxu0 0
    %1484 = vmatprep.mubr.bf16.mxu0 0
    %1485 = vmatmul.mubr.bf16.gmra.mxu0 %v1343
    %v1486 = vpop.f32.mrf.mxu0
    %v1487 = vadd.f32 %v1365, %v1486
    %v1488 = vpop.f32.mrf.mxu0
    %v1489 = vadd.f32 %v1369, %v1488
    %v1490 = vpop.f32.mrf.mxu0
    %v1491 = vpop.f32.mrf.mxu0
    %1492 = vdwg.mxu0
    %v1493 = vmax.f32 %v1487, 0.0
    %v1494 = vmax.f32 %v1489, 0.0
    %v1495 = vpack.c.bf16 %v1493, %v1493
    %v1496 = vpack.c.bf16 %v1494, %v1494
    %v1497 = vld [vmem:[#allocation7] sm:$0xff]
    %v1498 = vld [vmem:[#allocation7 + $0x8] sm:$0xff]
    %v1499 = vld [vmem:[#allocation7 + $0x10] sm:$0xff]
    %v1500 = vld [vmem:[#allocation7 + $0x18] sm:$0xff]
    %v1501 = vld [vmem:[#allocation7 + $0x20] sm:$0xff]
    %v1502 = vld [vmem:[#allocation7 + $0x28] sm:$0xff]
    %v1503 = vld [vmem:[#allocation7 + $0x30] sm:$0xff]
    %v1504 = vld [vmem:[#allocation7 + $0x38] sm:$0xff]
    %v1505 = vld [vmem:[#allocation7 + $0x40] sm:$0xff]
    %v1506 = vld [vmem:[#allocation7 + $0x48] sm:$0xff]
    %v1507 = vld [vmem:[#allocation7 + $0x50] sm:$0xff]
    %v1508 = vld [vmem:[#allocation7 + $0x58] sm:$0xff]
    %v1509 = vld [vmem:[#allocation7 + $0x60] sm:$0xff]
    %v1510 = vld [vmem:[#allocation7 + $0x68] sm:$0xff]
    %v1511 = vld [vmem:[#allocation7 + $0x70] sm:$0xff]
    %v1512 = vld [vmem:[#allocation7 + $0x78] sm:$0xff]
    %v1513 = vld [vmem:[#allocation7 + $0x80] sm:$0xff]
    %v1514 = vld [vmem:[#allocation7 + $0x88] sm:$0xff]
    %v1515 = vld [vmem:[#allocation7 + $0x90] sm:$0xff]
    %v1516 = vld [vmem:[#allocation7 + $0x98] sm:$0xff]
    %v1517 = vld [vmem:[#allocation7 + $0xa0] sm:$0xff]
    %v1518 = vld [vmem:[#allocation7 + $0xa8] sm:$0xff]
    %v1519 = vld [vmem:[#allocation7 + $0xb0] sm:$0xff]
    %v1520 = vld [vmem:[#allocation7 + $0xb8] sm:$0xff]
    %v1521 = vld [vmem:[#allocation7 + $0xc0] sm:$0xff]
    %v1522 = vld [vmem:[#allocation7 + $0xc8] sm:$0xff]
    %v1523 = vld [vmem:[#allocation7 + $0xd0] sm:$0xff]
    %v1524 = vld [vmem:[#allocation7 + $0xd8] sm:$0xff]
    %v1525 = vld [vmem:[#allocation7 + $0xe0] sm:$0xff]
    %v1526 = vld [vmem:[#allocation7 + $0xe8] sm:$0xff]
    %v1527 = vld [vmem:[#allocation7 + $0xf0] sm:$0xff]
    %v1528 = vld [vmem:[#allocation7 + $0xf8] sm:$0xff]
    %v1529 = vld [vmem:[#allocation7 + $0x100] sm:$0xff]
    %v1530 = vld [vmem:[#allocation7 + $0x108] sm:$0xff]
    %v1531 = vld [vmem:[#allocation7 + $0x110] sm:$0xff]
    %v1532 = vld [vmem:[#allocation7 + $0x118] sm:$0xff]
    %v1533 = vld [vmem:[#allocation7 + $0x120] sm:$0xff]
    %v1534 = vld [vmem:[#allocation7 + $0x128] sm:$0xff]
    %v1535 = vld [vmem:[#allocation7 + $0x130] sm:$0xff]
    %v1536 = vld [vmem:[#allocation7 + $0x138] sm:$0xff]
    %v1537 = vld [vmem:[#allocation7 + $0x140] sm:$0xff]
    %v1538 = vld [vmem:[#allocation7 + $0x148] sm:$0xff]
    %v1539 = vld [vmem:[#allocation7 + $0x150] sm:$0xff]
    %v1540 = vld [vmem:[#allocation7 + $0x158] sm:$0xff]
    %v1541 = vld [vmem:[#allocation7 + $0x160] sm:$0xff]
    %v1542 = vld [vmem:[#allocation7 + $0x168] sm:$0xff]
    %v1543 = vld [vmem:[#allocation7 + $0x170] sm:$0xff]
    %v1544 = vld [vmem:[#allocation7 + $0x178] sm:$0xff]
    %v1545 = vld [vmem:[#allocation7 + $0x180] sm:$0xff]
    %v1546 = vld [vmem:[#allocation7 + $0x188] sm:$0xff]
    %v1547 = vld [vmem:[#allocation7 + $0x190] sm:$0xff]
    %v1548 = vld [vmem:[#allocation7 + $0x198] sm:$0xff]
    %v1549 = vld [vmem:[#allocation7 + $0x1a0] sm:$0xff]
    %v1550 = vld [vmem:[#allocation7 + $0x1a8] sm:$0xff]
    %v1551 = vld [vmem:[#allocation7 + $0x1b0] sm:$0xff]
    %v1552 = vld [vmem:[#allocation7 + $0x1b8] sm:$0xff]
    %v1553 = vld [vmem:[#allocation7 + $0x1c0] sm:$0xff]
    %v1554 = vld [vmem:[#allocation7 + $0x1c8] sm:$0xff]
    %v1555 = vld [vmem:[#allocation7 + $0x1d0] sm:$0xff]
    %v1556 = vld [vmem:[#allocation7 + $0x1d8] sm:$0xff]
    %v1557 = vld [vmem:[#allocation7 + $0x1e0] sm:$0xff]
    %v1558 = vld [vmem:[#allocation7 + $0x1e8] sm:$0xff]
    %v1559 = vld [vmem:[#allocation7 + $0x1f0] sm:$0xff]
    %v1560 = vld [vmem:[#allocation7 + $0x1f8] sm:$0xff]
    %v1561 = vld [vmem:[#allocation9 + $0xc] sm:$0xf]
    %v1563 = vlaneseq
    %v1564 = vshrl.u32 %v1563, 7
    %v1565 = vsub.s32 0, %v1564
    %v1566 = vrot.slane %v1561, %v1565
    %v1567 = vlaneseq
    %v1568 = vshrl.u32 %v1567, 7
    %v1569 = vsub.s32 1, %v1568
    %v1570 = vrot.slane %v1561, %v1569
    %v1571 = vlaneseq
    %v1572 = vshrl.u32 %v1571, 7
    %v1573 = vsub.s32 2, %v1572
    %v1574 = vrot.slane %v1561, %v1573
    %v1575 = vlaneseq
    %v1576 = vshrl.u32 %v1575, 7
    %v1577 = vsub.s32 3, %v1576
    %v1578 = vrot.slane %v1561, %v1577
    %v1647 = vunpack.c.l.b16 %v1497
    %v1648 = vunpack.c.h.b16 %v1497
    %v1649 = vunpack.c.l.b16 %v1498
    %v1650 = vunpack.c.h.b16 %v1498
    %v1651 = vunpack.c.l.b16 %v1499
    %v1652 = vunpack.c.h.b16 %v1499
    %v1653 = vunpack.c.l.b16 %v1500
    %v1654 = vunpack.c.h.b16 %v1500
    %v1655 = vunpack.c.l.b16 %v1501
    %v1656 = vunpack.c.h.b16 %v1501
    %v1657 = vunpack.c.l.b16 %v1502
    %v1658 = vunpack.c.h.b16 %v1502
    %v1659 = vunpack.c.l.b16 %v1503
    %v1660 = vunpack.c.h.b16 %v1503
    %v1661 = vunpack.c.l.b16 %v1504
    %v1662 = vunpack.c.h.b16 %v1504
    %v1663 = vunpack.c.l.b16 %v1505
    %v1664 = vunpack.c.h.b16 %v1505
    %v1665 = vunpack.c.l.b16 %v1506
    %v1666 = vunpack.c.h.b16 %v1506
    %v1667 = vunpack.c.l.b16 %v1507
    %v1668 = vunpack.c.h.b16 %v1507
    %v1669 = vunpack.c.l.b16 %v1508
    %v1670 = vunpack.c.h.b16 %v1508
    %v1671 = vunpack.c.l.b16 %v1509
    %v1672 = vunpack.c.h.b16 %v1509
    %v1673 = vunpack.c.l.b16 %v1510
    %v1674 = vunpack.c.h.b16 %v1510
    %v1675 = vunpack.c.l.b16 %v1511
    %v1676 = vunpack.c.h.b16 %v1511
    %v1677 = vunpack.c.l.b16 %v1512
    %v1678 = vunpack.c.h.b16 %v1512
    %v1679 = vunpack.c.l.b16 %v1513
    %v1680 = vunpack.c.h.b16 %v1513
    %v1681 = vunpack.c.l.b16 %v1514
    %v1682 = vunpack.c.h.b16 %v1514
    %v1683 = vunpack.c.l.b16 %v1515
    %v1684 = vunpack.c.h.b16 %v1515
    %v1685 = vunpack.c.l.b16 %v1516
    %v1686 = vunpack.c.h.b16 %v1516
    %v1687 = vunpack.c.l.b16 %v1517
    %v1688 = vunpack.c.h.b16 %v1517
    %v1689 = vunpack.c.l.b16 %v1518
    %v1690 = vunpack.c.h.b16 %v1518
    %v1691 = vunpack.c.l.b16 %v1519
    %v1692 = vunpack.c.h.b16 %v1519
    %v1693 = vunpack.c.l.b16 %v1520
    %v1694 = vunpack.c.h.b16 %v1520
    %v1695 = vunpack.c.l.b16 %v1521
    %v1696 = vunpack.c.h.b16 %v1521
    %v1697 = vunpack.c.l.b16 %v1522
    %v1698 = vunpack.c.h.b16 %v1522
    %v1699 = vunpack.c.l.b16 %v1523
    %v1700 = vunpack.c.h.b16 %v1523
    %v1701 = vunpack.c.l.b16 %v1524
    %v1702 = vunpack.c.h.b16 %v1524
    %v1703 = vunpack.c.l.b16 %v1525
    %v1704 = vunpack.c.h.b16 %v1525
    %v1705 = vunpack.c.l.b16 %v1526
    %v1706 = vunpack.c.h.b16 %v1526
    %v1707 = vunpack.c.l.b16 %v1527
    %v1708 = vunpack.c.h.b16 %v1527
    %v1709 = vunpack.c.l.b16 %v1528
    %v1710 = vunpack.c.h.b16 %v1528
    %v1711 = vunpack.c.l.b16 %v1529
    %v1712 = vunpack.c.h.b16 %v1529
    %v1713 = vunpack.c.l.b16 %v1530
    %v1714 = vunpack.c.h.b16 %v1530
    %v1715 = vunpack.c.l.b16 %v1531
    %v1716 = vunpack.c.h.b16 %v1531
    %v1717 = vunpack.c.l.b16 %v1532
    %v1718 = vunpack.c.h.b16 %v1532
    %v1719 = vunpack.c.l.b16 %v1533
    %v1720 = vunpack.c.h.b16 %v1533
    %v1721 = vunpack.c.l.b16 %v1534
    %v1722 = vunpack.c.h.b16 %v1534
    %v1723 = vunpack.c.l.b16 %v1535
    %v1724 = vunpack.c.h.b16 %v1535
    %v1725 = vunpack.c.l.b16 %v1536
    %v1726 = vunpack.c.h.b16 %v1536
    %v1727 = vunpack.c.l.b16 %v1537
    %v1728 = vunpack.c.h.b16 %v1537
    %v1729 = vunpack.c.l.b16 %v1538
    %v1730 = vunpack.c.h.b16 %v1538
    %v1731 = vunpack.c.l.b16 %v1539
    %v1732 = vunpack.c.h.b16 %v1539
    %v1733 = vunpack.c.l.b16 %v1540
    %v1734 = vunpack.c.h.b16 %v1540
    %v1735 = vunpack.c.l.b16 %v1541
    %v1736 = vunpack.c.h.b16 %v1541
    %v1737 = vunpack.c.l.b16 %v1542
    %v1738 = vunpack.c.h.b16 %v1542
    %v1739 = vunpack.c.l.b16 %v1543
    %v1740 = vunpack.c.h.b16 %v1543
    %v1741 = vunpack.c.l.b16 %v1544
    %v1742 = vunpack.c.h.b16 %v1544
    %v1743 = vunpack.c.l.b16 %v1545
    %v1744 = vunpack.c.h.b16 %v1545
    %v1745 = vunpack.c.l.b16 %v1546
    %v1746 = vunpack.c.h.b16 %v1546
    %v1747 = vunpack.c.l.b16 %v1547
    %v1748 = vunpack.c.h.b16 %v1547
    %v1749 = vunpack.c.l.b16 %v1548
    %v1750 = vunpack.c.h.b16 %v1548
    %v1751 = vunpack.c.l.b16 %v1549
    %v1752 = vunpack.c.h.b16 %v1549
    %v1753 = vunpack.c.l.b16 %v1550
    %v1754 = vunpack.c.h.b16 %v1550
    %v1755 = vunpack.c.l.b16 %v1551
    %v1756 = vunpack.c.h.b16 %v1551
    %v1757 = vunpack.c.l.b16 %v1552
    %v1758 = vunpack.c.h.b16 %v1552
    %v1759 = vunpack.c.l.b16 %v1553
    %v1760 = vunpack.c.h.b16 %v1553
    %v1761 = vunpack.c.l.b16 %v1554
    %v1762 = vunpack.c.h.b16 %v1554
    %v1763 = vunpack.c.l.b16 %v1555
    %v1764 = vunpack.c.h.b16 %v1555
    %v1765 = vunpack.c.l.b16 %v1556
    %v1766 = vunpack.c.h.b16 %v1556
    %v1767 = vunpack.c.l.b16 %v1557
    %v1768 = vunpack.c.h.b16 %v1557
    %v1769 = vunpack.c.l.b16 %v1558
    %v1770 = vunpack.c.h.b16 %v1558
    %v1771 = vunpack.c.l.b16 %v1559
    %v1772 = vunpack.c.h.b16 %v1559
    %v1773 = vunpack.c.l.b16 %v1560
    %v1774 = vunpack.c.h.b16 %v1560
    %v1775 = vpack.c.b16 %v1651, %v1647
    %v1776 = vpack.c.b16 %v1652, %v1648
    %v1777 = vpack.c.b16 %v1653, %v1649
    %v1778 = vpack.c.b16 %v1654, %v1650
    %v1779 = vpack.c.b16 %v1659, %v1655
    %v1780 = vpack.c.b16 %v1660, %v1656
    %v1781 = vpack.c.b16 %v1661, %v1657
    %v1782 = vpack.c.b16 %v1662, %v1658
    %v1783 = vpack.c.b16 %v1667, %v1663
    %v1784 = vpack.c.b16 %v1668, %v1664
    %v1785 = vpack.c.b16 %v1669, %v1665
    %v1786 = vpack.c.b16 %v1670, %v1666
    %v1787 = vpack.c.b16 %v1675, %v1671
    %v1788 = vpack.c.b16 %v1676, %v1672
    %v1789 = vpack.c.b16 %v1677, %v1673
    %v1790 = vpack.c.b16 %v1678, %v1674
    %v1791 = vpack.c.b16 %v1683, %v1679
    %v1792 = vpack.c.b16 %v1684, %v1680
    %v1793 = vpack.c.b16 %v1685, %v1681
    %v1794 = vpack.c.b16 %v1686, %v1682
    %v1795 = vpack.c.b16 %v1691, %v1687
    %v1796 = vpack.c.b16 %v1692, %v1688
    %v1797 = vpack.c.b16 %v1693, %v1689
    %v1798 = vpack.c.b16 %v1694, %v1690
    %v1799 = vpack.c.b16 %v1699, %v1695
    %v1800 = vpack.c.b16 %v1700, %v1696
    %v1801 = vpack.c.b16 %v1701, %v1697
    %v1802 = vpack.c.b16 %v1702, %v1698
    %v1803 = vpack.c.b16 %v1707, %v1703
    %v1804 = vpack.c.b16 %v1708, %v1704
    %v1805 = vpack.c.b16 %v1709, %v1705
    %v1806 = vpack.c.b16 %v1710, %v1706
    %v1807 = vpack.c.b16 %v1715, %v1711
    %v1808 = vpack.c.b16 %v1716, %v1712
    %v1809 = vpack.c.b16 %v1717, %v1713
    %v1810 = vpack.c.b16 %v1718, %v1714
    %v1811 = vpack.c.b16 %v1723, %v1719
    %v1812 = vpack.c.b16 %v1724, %v1720
    %v1813 = vpack.c.b16 %v1725, %v1721
    %v1814 = vpack.c.b16 %v1726, %v1722
    %v1815 = vpack.c.b16 %v1731, %v1727
    %v1816 = vpack.c.b16 %v1732, %v1728
    %v1817 = vpack.c.b16 %v1733, %v1729
    %v1818 = vpack.c.b16 %v1734, %v1730
    %v1819 = vpack.c.b16 %v1739, %v1735
    %v1820 = vpack.c.b16 %v1740, %v1736
    %v1821 = vpack.c.b16 %v1741, %v1737
    %v1822 = vpack.c.b16 %v1742, %v1738
    %v1823 = vpack.c.b16 %v1747, %v1743
    %v1824 = vpack.c.b16 %v1748, %v1744
    %v1825 = vpack.c.b16 %v1749, %v1745
    %v1826 = vpack.c.b16 %v1750, %v1746
    %v1827 = vpack.c.b16 %v1755, %v1751
    %v1828 = vpack.c.b16 %v1756, %v1752
    %v1829 = vpack.c.b16 %v1757, %v1753
    %v1830 = vpack.c.b16 %v1758, %v1754
    %v1831 = vpack.c.b16 %v1763, %v1759
    %v1832 = vpack.c.b16 %v1764, %v1760
    %v1833 = vpack.c.b16 %v1765, %v1761
    %v1834 = vpack.c.b16 %v1766, %v1762
    %v1835 = vpack.c.b16 %v1771, %v1767
    %v1836 = vpack.c.b16 %v1772, %v1768
    %v1837 = vpack.c.b16 %v1773, %v1769
    %v1838 = vpack.c.b16 %v1774, %v1770
    %1903 = vmatprep.subr.bf16.mxu0 %v1804
    %1904 = vmatpush1.bf16.msra.mxu0 %v1803
    %1905 = vmatprep.subr.bf16.mxu0 %v1800
    %1906 = vmatpush1.bf16.msra.mxu0 %v1799
    %1907 = vmatprep.subr.bf16.mxu0 %v1796
    %1908 = vmatpush1.bf16.msra.mxu0 %v1795
    %1909 = vmatprep.subr.bf16.mxu0 %v1792
    %1910 = vmatpush1.bf16.msra.mxu0 %v1791
    %1911 = vmatprep.subr.bf16.mxu0 %v1788
    %1912 = vmatpush1.bf16.msra.mxu0 %v1787
    %1913 = vmatprep.subr.bf16.mxu0 %v1784
    %1914 = vmatpush1.bf16.msra.mxu0 %v1783
    %1915 = vmatprep.subr.bf16.mxu0 %v1780
    %1916 = vmatpush1.bf16.msra.mxu0 %v1779
    %1917 = vmatprep.subr.bf16.mxu0 %v1776
    %1918 = vmatpush1.bf16.msra.mxu0 %v1775
    %1919 = vmatprep.subr.bf16.mxu0 %v1836
    %1920 = vmatpush2.bf16.msra.mxu0 %v1835
    %1921 = vmatprep.subr.bf16.mxu0 %v1832
    %1922 = vmatpush2.bf16.msra.mxu0 %v1831
    %1923 = vmatprep.subr.bf16.mxu0 %v1828
    %1924 = vmatpush2.bf16.msra.mxu0 %v1827
    %1925 = vmatprep.subr.bf16.mxu0 %v1824
    %1926 = vmatpush2.bf16.msra.mxu0 %v1823
    %1927 = vmatprep.subr.bf16.mxu0 %v1820
    %1928 = vmatpush2.bf16.msra.mxu0 %v1819
    %1929 = vmatprep.subr.bf16.mxu0 %v1816
    %1930 = vmatpush2.bf16.msra.mxu0 %v1815
    %1931 = vmatprep.subr.bf16.mxu0 %v1812
    %1932 = vmatpush2.bf16.msra.mxu0 %v1811
    %1933 = vmatprep.subr.bf16.mxu0 %v1808
    %1934 = vmatpush2.bf16.msra.mxu0 %v1807
    %1935 = vmatprep.mubr.bf16.mxu0 %v1496
    %1936 = vmatmul.mubr.bf16.gmra.mxu0 %v1495
    %v1937 = vpop.f32.mrf.mxu0
    %v1938 = vadd.f32 %v1566, %v1937
    %v1939 = vpop.f32.mrf.mxu0
    %v1940 = vadd.f32 %v1570, %v1939
    %v1941 = vpop.f32.mrf.mxu0
    %v1942 = vpop.f32.mrf.mxu0
    %1943 = vdwg.mxu0
    %1944 = vmatprep.subr.bf16.mxu0 %v1806
    %1945 = vmatpush1.bf16.msra.mxu0 %v1805
    %1946 = vmatprep.subr.bf16.mxu0 %v1802
    %1947 = vmatpush1.bf16.msra.mxu0 %v1801
    %1948 = vmatprep.subr.bf16.mxu0 %v1798
    %1949 = vmatpush1.bf16.msra.mxu0 %v1797
    %1950 = vmatprep.subr.bf16.mxu0 %v1794
    %1951 = vmatpush1.bf16.msra.mxu0 %v1793
    %1952 = vmatprep.subr.bf16.mxu0 %v1790
    %1953 = vmatpush1.bf16.msra.mxu0 %v1789
    %1954 = vmatprep.subr.bf16.mxu0 %v1786
    %1955 = vmatpush1.bf16.msra.mxu0 %v1785
    %1956 = vmatprep.subr.bf16.mxu0 %v1782
    %1957 = vmatpush1.bf16.msra.mxu0 %v1781
    %1958 = vmatprep.subr.bf16.mxu0 %v1778
    %1959 = vmatpush1.bf16.msra.mxu0 %v1777
    %1960 = vmatprep.subr.bf16.mxu0 %v1838
    %1961 = vmatpush2.bf16.msra.mxu0 %v1837
    %1962 = vmatprep.subr.bf16.mxu0 %v1834
    %1963 = vmatpush2.bf16.msra.mxu0 %v1833
    %1964 = vmatprep.subr.bf16.mxu0 %v1830
    %1965 = vmatpush2.bf16.msra.mxu0 %v1829
    %1966 = vmatprep.subr.bf16.mxu0 %v1826
    %1967 = vmatpush2.bf16.msra.mxu0 %v1825
    %1968 = vmatprep.subr.bf16.mxu0 %v1822
    %1969 = vmatpush2.bf16.msra.mxu0 %v1821
    %1970 = vmatprep.subr.bf16.mxu0 %v1818
    %1971 = vmatpush2.bf16.msra.mxu0 %v1817
    %1972 = vmatprep.subr.bf16.mxu0 %v1814
    %1973 = vmatpush2.bf16.msra.mxu0 %v1813
    %1974 = vmatprep.subr.bf16.mxu0 %v1810
    %1975 = vmatpush2.bf16.msra.mxu0 %v1809
    %1976 = vmatprep.mubr.bf16.mxu0 %v1496
    %1977 = vmatmul.mubr.bf16.gmra.mxu0 %v1495
    %v1978 = vpop.f32.mrf.mxu0
    %v1979 = vadd.f32 %v1574, %v1978
    %v1980 = vpop.f32.mrf.mxu0
    %v1981 = vadd.f32 %v1578, %v1980
    %v1982 = vpop.f32.mrf.mxu0
    %v1983 = vpop.f32.mrf.mxu0
    %1984 = vdwg.mxu0
    %v1985 = vmax.f32 %v1938, 0.0
    %v1986 = vmax.f32 %v1940, 0.0
    %v1987 = vmax.f32 %v1979, 0.0
    %v1988 = vmax.f32 %v1981, 0.0
    %v1989 = vpack.c.bf16 %v1985, %v1985
    %v1990 = vpack.c.bf16 %v1986, %v1986
    %v1991 = vpack.c.bf16 %v1987, %v1987
    %v1992 = vpack.c.bf16 %v1988, %v1988
    %v1993 = vld [vmem:[%s11] sm:$0xf]
    %v1994 = vld [vmem:[%s11 + $0x4] sm:$0xf]
    %v1995 = vld [vmem:[%s11 + $0x8] sm:$0xf]
    %v1996 = vld [vmem:[%s11 + $0xc] sm:$0xf]
    %v1997 = vld [vmem:[%s11 + $0x10] sm:$0xf]
    %v1998 = vld [vmem:[%s11 + $0x14] sm:$0xf]
    %v1999 = vld [vmem:[%s11 + $0x18] sm:$0xf]
    %v2000 = vld [vmem:[%s11 + $0x1c] sm:$0xf]
    %v2001 = vld [vmem:[%s11 + $0x20] sm:$0xf]
    %v2002 = vld [vmem:[%s11 + $0x24] sm:$0xf]
    %v2003 = vld [vmem:[%s11 + $0x28] sm:$0xf]
    %v2004 = vld [vmem:[%s11 + $0x2c] sm:$0xf]
    %v2005 = vld [vmem:[%s11 + $0x30] sm:$0xf]
    %v2006 = vld [vmem:[%s11 + $0x34] sm:$0xf]
    %v2007 = vld [vmem:[%s11 + $0x38] sm:$0xf]
    %v2008 = vld [vmem:[%s11 + $0x3c] sm:$0xf]
    %v2009 = vld [vmem:[%s11 + $0x40] sm:$0xf]
    %v2010 = vld [vmem:[%s11 + $0x44] sm:$0xf]
    %v2011 = vld [vmem:[%s11 + $0x48] sm:$0xf]
    %v2012 = vld [vmem:[%s11 + $0x4c] sm:$0xf]
    %v2013 = vld [vmem:[%s11 + $0x50] sm:$0xf]
    %v2014 = vld [vmem:[%s11 + $0x54] sm:$0xf]
    %v2015 = vld [vmem:[%s11 + $0x58] sm:$0xf]
    %v2016 = vld [vmem:[%s11 + $0x5c] sm:$0xf]
    %v2017 = vld [vmem:[%s11 + $0x60] sm:$0xf]
    %v2018 = vld [vmem:[%s11 + $0x64] sm:$0xf]
    %v2019 = vld [vmem:[%s11 + $0x68] sm:$0xf]
    %v2020 = vld [vmem:[%s11 + $0x6c] sm:$0xf]
    %v2021 = vld [vmem:[%s11 + $0x70] sm:$0xf]
    %v2022 = vld [vmem:[%s11 + $0x74] sm:$0xf]
    %v2023 = vld [vmem:[%s11 + $0x78] sm:$0xf]
    %v2024 = vld [vmem:[%s11 + $0x7c] sm:$0xf]
    %v2025 = vld [vmem:[%s11 + $0x80] sm:$0xf]
    %v2026 = vld [vmem:[%s11 + $0x84] sm:$0xf]
    %v2027 = vld [vmem:[%s11 + $0x88] sm:$0xf]
    %v2028 = vld [vmem:[%s11 + $0x8c] sm:$0xf]
    %v2029 = vld [vmem:[%s11 + $0x90] sm:$0xf]
    %v2030 = vld [vmem:[%s11 + $0x94] sm:$0xf]
    %v2031 = vld [vmem:[%s11 + $0x98] sm:$0xf]
    %v2032 = vld [vmem:[%s11 + $0x9c] sm:$0xf]
    %v2033 = vld [vmem:[%s11 + $0xa0] sm:$0xf]
    %v2034 = vld [vmem:[%s11 + $0xa4] sm:$0xf]
    %v2035 = vld [vmem:[%s11 + $0xa8] sm:$0xf]
    %v2036 = vld [vmem:[%s11 + $0xac] sm:$0xf]
    %v2037 = vld [vmem:[%s11 + $0xb0] sm:$0xf]
    %v2038 = vld [vmem:[%s11 + $0xb4] sm:$0xf]
    %v2039 = vld [vmem:[%s11 + $0xb8] sm:$0xf]
    %v2040 = vld [vmem:[%s11 + $0xbc] sm:$0xf]
    %v2041 = vld [vmem:[%s11 + $0xc0] sm:$0xf]
    %v2042 = vld [vmem:[%s11 + $0xc4] sm:$0xf]
    %v2043 = vld [vmem:[%s11 + $0xc8] sm:$0xf]
    %v2044 = vld [vmem:[%s11 + $0xcc] sm:$0xf]
    %v2045 = vld [vmem:[%s11 + $0xd0] sm:$0xf]
    %v2046 = vld [vmem:[%s11 + $0xd4] sm:$0xf]
    %v2047 = vld [vmem:[%s11 + $0xd8] sm:$0xf]
    %v2048 = vld [vmem:[%s11 + $0xdc] sm:$0xf]
    %v2049 = vld [vmem:[%s11 + $0xe0] sm:$0xf]
    %v2050 = vld [vmem:[%s11 + $0xe4] sm:$0xf]
    %v2051 = vld [vmem:[%s11 + $0xe8] sm:$0xf]
    %v2052 = vld [vmem:[%s11 + $0xec] sm:$0xf]
    %v2053 = vld [vmem:[%s11 + $0xf0] sm:$0xf]
    %v2054 = vld [vmem:[%s11 + $0xf4] sm:$0xf]
    %v2055 = vld [vmem:[%s11 + $0xf8] sm:$0xf]
    %v2056 = vld [vmem:[%s11 + $0xfc] sm:$0xf]
    %v2057 = vld [vmem:[#allocation9 + $0x10] sm:$0x1]
    %v2059 = vlaneseq
    %v2060 = vshrl.u32 %v2059, 7
    %v2061 = vsub.s32 0, %v2060
    %v2062 = vrot.slane %v2057, %v2061
    %v2128 = vunpack.c.l.b16 %v1993
    %v2129 = vunpack.c.l.b16 %v1994
    %v2130 = vunpack.c.l.b16 %v1995
    %v2131 = vunpack.c.l.b16 %v1996
    %v2132 = vunpack.c.l.b16 %v1997
    %v2133 = vunpack.c.l.b16 %v1998
    %v2134 = vunpack.c.l.b16 %v1999
    %v2135 = vunpack.c.l.b16 %v2000
    %v2136 = vunpack.c.l.b16 %v2001
    %v2137 = vunpack.c.l.b16 %v2002
    %v2138 = vunpack.c.l.b16 %v2003
    %v2139 = vunpack.c.l.b16 %v2004
    %v2140 = vunpack.c.l.b16 %v2005
    %v2141 = vunpack.c.l.b16 %v2006
    %v2142 = vunpack.c.l.b16 %v2007
    %v2143 = vunpack.c.l.b16 %v2008
    %v2144 = vunpack.c.l.b16 %v2009
    %v2145 = vunpack.c.l.b16 %v2010
    %v2146 = vunpack.c.l.b16 %v2011
    %v2147 = vunpack.c.l.b16 %v2012
    %v2148 = vunpack.c.l.b16 %v2013
    %v2149 = vunpack.c.l.b16 %v2014
    %v2150 = vunpack.c.l.b16 %v2015
    %v2151 = vunpack.c.l.b16 %v2016
    %v2152 = vunpack.c.l.b16 %v2017
    %v2153 = vunpack.c.l.b16 %v2018
    %v2154 = vunpack.c.l.b16 %v2019
    %v2155 = vunpack.c.l.b16 %v2020
    %v2156 = vunpack.c.l.b16 %v2021
    %v2157 = vunpack.c.l.b16 %v2022
    %v2158 = vunpack.c.l.b16 %v2023
    %v2159 = vunpack.c.l.b16 %v2024
    %v2160 = vunpack.c.l.b16 %v2025
    %v2161 = vunpack.c.l.b16 %v2026
    %v2162 = vunpack.c.l.b16 %v2027
    %v2163 = vunpack.c.l.b16 %v2028
    %v2164 = vunpack.c.l.b16 %v2029
    %v2165 = vunpack.c.l.b16 %v2030
    %v2166 = vunpack.c.l.b16 %v2031
    %v2167 = vunpack.c.l.b16 %v2032
    %v2168 = vunpack.c.l.b16 %v2033
    %v2169 = vunpack.c.l.b16 %v2034
    %v2170 = vunpack.c.l.b16 %v2035
    %v2171 = vunpack.c.l.b16 %v2036
    %v2172 = vunpack.c.l.b16 %v2037
    %v2173 = vunpack.c.l.b16 %v2038
    %v2174 = vunpack.c.l.b16 %v2039
    %v2175 = vunpack.c.l.b16 %v2040
    %v2176 = vunpack.c.l.b16 %v2041
    %v2177 = vunpack.c.l.b16 %v2042
    %v2178 = vunpack.c.l.b16 %v2043
    %v2179 = vunpack.c.l.b16 %v2044
    %v2180 = vunpack.c.l.b16 %v2045
    %v2181 = vunpack.c.l.b16 %v2046
    %v2182 = vunpack.c.l.b16 %v2047
    %v2183 = vunpack.c.l.b16 %v2048
    %v2184 = vunpack.c.l.b16 %v2049
    %v2185 = vunpack.c.l.b16 %v2050
    %v2186 = vunpack.c.l.b16 %v2051
    %v2187 = vunpack.c.l.b16 %v2052
    %v2188 = vunpack.c.l.b16 %v2053
    %v2189 = vunpack.c.l.b16 %v2054
    %v2190 = vunpack.c.l.b16 %v2055
    %v2191 = vunpack.c.l.b16 %v2056
    %v2192 = vpack.c.b16 %v2129, %v2128
    %v2193 = vpack.c.b16 %v2131, %v2130
    %v2194 = vpack.c.b16 %v2133, %v2132
    %v2195 = vpack.c.b16 %v2135, %v2134
    %v2196 = vpack.c.b16 %v2137, %v2136
    %v2197 = vpack.c.b16 %v2139, %v2138
    %v2198 = vpack.c.b16 %v2141, %v2140
    %v2199 = vpack.c.b16 %v2143, %v2142
    %v2200 = vpack.c.b16 %v2145, %v2144
    %v2201 = vpack.c.b16 %v2147, %v2146
    %v2202 = vpack.c.b16 %v2149, %v2148
    %v2203 = vpack.c.b16 %v2151, %v2150
    %v2204 = vpack.c.b16 %v2153, %v2152
    %v2205 = vpack.c.b16 %v2155, %v2154
    %v2206 = vpack.c.b16 %v2157, %v2156
    %v2207 = vpack.c.b16 %v2159, %v2158
    %v2208 = vpack.c.b16 %v2161, %v2160
    %v2209 = vpack.c.b16 %v2163, %v2162
    %v2210 = vpack.c.b16 %v2165, %v2164
    %v2211 = vpack.c.b16 %v2167, %v2166
    %v2212 = vpack.c.b16 %v2169, %v2168
    %v2213 = vpack.c.b16 %v2171, %v2170
    %v2214 = vpack.c.b16 %v2173, %v2172
    %v2215 = vpack.c.b16 %v2175, %v2174
    %v2216 = vpack.c.b16 %v2177, %v2176
    %v2217 = vpack.c.b16 %v2179, %v2178
    %v2218 = vpack.c.b16 %v2181, %v2180
    %v2219 = vpack.c.b16 %v2183, %v2182
    %v2220 = vpack.c.b16 %v2185, %v2184
    %v2221 = vpack.c.b16 %v2187, %v2186
    %v2222 = vpack.c.b16 %v2189, %v2188
    %v2223 = vpack.c.b16 %v2191, %v2190
    %2256 = vmatprep.subr.bf16.mxu0 0
    %2257 = vmatpush1.bf16.msra.mxu0 %v2199
    %2258 = vmatprep.subr.bf16.mxu0 0
    %2259 = vmatpush1.bf16.msra.mxu0 %v2198
    %2260 = vmatprep.subr.bf16.mxu0 0
    %2261 = vmatpush1.bf16.msra.mxu0 %v2197
    %2262 = vmatprep.subr.bf16.mxu0 0
    %2263 = vmatpush1.bf16.msra.mxu0 %v2196
    %2264 = vmatprep.subr.bf16.mxu0 0
    %2265 = vmatpush1.bf16.msra.mxu0 %v2195
    %2266 = vmatprep.subr.bf16.mxu0 0
    %2267 = vmatpush1.bf16.msra.mxu0 %v2194
    %2268 = vmatprep.subr.bf16.mxu0 0
    %2269 = vmatpush1.bf16.msra.mxu0 %v2193
    %2270 = vmatprep.subr.bf16.mxu0 0
    %2271 = vmatpush1.bf16.msra.mxu0 %v2192
    %2272 = vmatprep.subr.bf16.mxu0 0
    %2273 = vmatpush2.bf16.msra.mxu0 %v2207
    %2274 = vmatprep.subr.bf16.mxu0 0
    %2275 = vmatpush2.bf16.msra.mxu0 %v2206
    %2276 = vmatprep.subr.bf16.mxu0 0
    %2277 = vmatpush2.bf16.msra.mxu0 %v2205
    %2278 = vmatprep.subr.bf16.mxu0 0
    %2279 = vmatpush2.bf16.msra.mxu0 %v2204
    %2280 = vmatprep.subr.bf16.mxu0 0
    %2281 = vmatpush2.bf16.msra.mxu0 %v2203
    %2282 = vmatprep.subr.bf16.mxu0 0
    %2283 = vmatpush2.bf16.msra.mxu0 %v2202
    %2284 = vmatprep.subr.bf16.mxu0 0
    %2285 = vmatpush2.bf16.msra.mxu0 %v2201
    %2286 = vmatprep.subr.bf16.mxu0 0
    %2287 = vmatpush2.bf16.msra.mxu0 %v2200
    %2288 = vmatprep.mubr.bf16.mxu0 %v1990
    %2289 = vmatmul.mubr.bf16.gmra.mxu0 %v1989
    %v2290 = vpop.f32.mrf.mxu0
    %v2291 = vadd.f32 %v2062, %v2290
    %v2292 = vpop.f32.mrf.mxu0
    %v2293 = vpop.f32.mrf.mxu0
    %v2294 = vpop.f32.mrf.mxu0
    %2295 = vdwg.mxu0
    %2296 = vmatprep.subr.bf16.mxu0 0
    %2297 = vmatpush1.bf16.msra.mxu0 %v2215
    %2298 = vmatprep.subr.bf16.mxu0 0
    %2299 = vmatpush1.bf16.msra.mxu0 %v2214
    %2300 = vmatprep.subr.bf16.mxu0 0
    %2301 = vmatpush1.bf16.msra.mxu0 %v2213
    %2302 = vmatprep.subr.bf16.mxu0 0
    %2303 = vmatpush1.bf16.msra.mxu0 %v2212
    %2304 = vmatprep.subr.bf16.mxu0 0
    %2305 = vmatpush1.bf16.msra.mxu0 %v2211
    %2306 = vmatprep.subr.bf16.mxu0 0
    %2307 = vmatpush1.bf16.msra.mxu0 %v2210
    %2308 = vmatprep.subr.bf16.mxu0 0
    %2309 = vmatpush1.bf16.msra.mxu0 %v2209
    %2310 = vmatprep.subr.bf16.mxu0 0
    %2311 = vmatpush1.bf16.msra.mxu0 %v2208
    %2312 = vmatprep.subr.bf16.mxu0 0
    %2313 = vmatpush2.bf16.msra.mxu0 %v2223
    %2314 = vmatprep.subr.bf16.mxu0 0
    %2315 = vmatpush2.bf16.msra.mxu0 %v2222
    %2316 = vmatprep.subr.bf16.mxu0 0
    %2317 = vmatpush2.bf16.msra.mxu0 %v2221
    %2318 = vmatprep.subr.bf16.mxu0 0
    %2319 = vmatpush2.bf16.msra.mxu0 %v2220
    %2320 = vmatprep.subr.bf16.mxu0 0
    %2321 = vmatpush2.bf16.msra.mxu0 %v2219
    %2322 = vmatprep.subr.bf16.mxu0 0
    %2323 = vmatpush2.bf16.msra.mxu0 %v2218
    %2324 = vmatprep.subr.bf16.mxu0 0
    %2325 = vmatpush2.bf16.msra.mxu0 %v2217
    %2326 = vmatprep.subr.bf16.mxu0 0
    %2327 = vmatpush2.bf16.msra.mxu0 %v2216
    %2328 = vmatprep.mubr.bf16.mxu0 %v1992
    %2329 = vmatmul.mubr.bf16.gmra.mxu0 %v1991
    %v2330 = vpop.f32.mrf.mxu0
    %v2331 = vadd.f32 %v2291, %v2330
    %v2332 = vpop.f32.mrf.mxu0
    %v2333 = vpop.f32.mrf.mxu0
    %v2334 = vpop.f32.mrf.mxu0
    %2335 = vdwg.mxu0
    %vm2338 = vcmask 1041409
    %v2339 = vsel %vm2338, %v392, %v391
    %2342 = vrot.lane.b32.xlu0 %v2331, 64
    %v2343 = vpop.permute.xlu0 %2342
    %v2345 = vsel %vm218, %v1337, %v2343
    %v2346 = vpack.c.bf16 %v2339, %v2339
    %v2347 = vpack.c.bf16 %v2345, %v2345
    %v2348 = vld [vmem:[%s12] sm:$0xff]
    %v2349 = vld [vmem:[%s12 + $0x8] sm:$0xff]
    %v2350 = vld [vmem:[%s12 + $0x10] sm:$0xff]
    %v2351 = vld [vmem:[%s12 + $0x18] sm:$0xff]
    %v2352 = vld [vmem:[%s12 + $0x20] sm:$0xff]
    %v2353 = vld [vmem:[%s12 + $0x28] sm:$0xff]
    %v2354 = vld [vmem:[%s12 + $0x30] sm:$0xff]
    %v2355 = vld [vmem:[%s12 + $0x38] sm:$0xff]
    %v2356 = vld [vmem:[%s12 + $0x40] sm:$0xff]
    %v2357 = vld [vmem:[%s12 + $0x48] sm:$0xff]
    %v2358 = vld [vmem:[%s12 + $0x50] sm:$0xff]
    %v2359 = vld [vmem:[%s12 + $0x58] sm:$0xff]
    %v2360 = vld [vmem:[%s12 + $0x60] sm:$0xff]
    %v2361 = vld [vmem:[%s12 + $0x68] sm:$0xff]
    %v2362 = vld [vmem:[%s12 + $0x70] sm:$0xff]
    %v2363 = vld [vmem:[%s12 + $0x78] sm:$0xff]
    %v2364 = vld [vmem:[%s12 + $0x80] sm:$0xff]
    %v2365 = vld [vmem:[%s12 + $0x88] sm:$0xff]
    %v2366 = vld [vmem:[%s12 + $0x90] sm:$0xff]
    %v2367 = vld [vmem:[%s12 + $0x98] sm:$0xff]
    %v2368 = vld [vmem:[%s12 + $0xa0] sm:$0xff]
    %v2369 = vld [vmem:[%s12 + $0xa8] sm:$0xff]
    %v2370 = vld [vmem:[%s12 + $0xb0] sm:$0xff]
    %v2371 = vld [vmem:[%s12 + $0xb8] sm:$0xff]
    %v2372 = vld [vmem:[%s12 + $0xc0] sm:$0xff]
    %v2373 = vld [vmem:[%s12 + $0xc8] sm:$0xff]
    %v2374 = vld [vmem:[%s12 + $0xd0] sm:$0xff]
    %v2375 = vld [vmem:[%s12 + $0xd8] sm:$0xff]
    %v2376 = vld [vmem:[%s12 + $0xe0] sm:$0xff]
    %v2377 = vld [vmem:[%s12 + $0xe8] sm:$0xff]
    %v2378 = vld [vmem:[%s12 + $0xf0] sm:$0xff]
    %v2379 = vld [vmem:[%s12 + $0xf8] sm:$0xff]
    %v2380 = vld [vmem:[#allocation9 + $0x11] sm:$0x3]
    %v2382 = vlaneseq
    %v2383 = vshrl.u32 %v2382, 7
    %v2384 = vsub.s32 0, %v2383
    %v2385 = vrot.slane %v2380, %v2384
    %v2386 = vlaneseq
    %v2387 = vshrl.u32 %v2386, 7
    %v2388 = vsub.s32 1, %v2387
    %v2389 = vrot.slane %v2380, %v2388
    %v2424 = vunpack.c.l.b16 %v2348
    %v2425 = vunpack.c.h.b16 %v2348
    %v2426 = vunpack.c.l.b16 %v2349
    %v2427 = vunpack.c.h.b16 %v2349
    %v2428 = vunpack.c.l.b16 %v2350
    %v2429 = vunpack.c.h.b16 %v2350
    %v2430 = vunpack.c.l.b16 %v2351
    %v2431 = vunpack.c.h.b16 %v2351
    %v2432 = vunpack.c.l.b16 %v2352
    %v2433 = vunpack.c.h.b16 %v2352
    %v2434 = vunpack.c.l.b16 %v2353
    %v2435 = vunpack.c.h.b16 %v2353
    %v2436 = vunpack.c.l.b16 %v2354
    %v2437 = vunpack.c.h.b16 %v2354
    %v2438 = vunpack.c.l.b16 %v2355
    %v2439 = vunpack.c.h.b16 %v2355
    %v2440 = vunpack.c.l.b16 %v2356
    %v2441 = vunpack.c.h.b16 %v2356
    %v2442 = vunpack.c.l.b16 %v2357
    %v2443 = vunpack.c.h.b16 %v2357
    %v2444 = vunpack.c.l.b16 %v2358
    %v2445 = vunpack.c.h.b16 %v2358
    %v2446 = vunpack.c.l.b16 %v2359
    %v2447 = vunpack.c.h.b16 %v2359
    %v2448 = vunpack.c.l.b16 %v2360
    %v2449 = vunpack.c.h.b16 %v2360
    %v2450 = vunpack.c.l.b16 %v2361
    %v2451 = vunpack.c.h.b16 %v2361
    %v2452 = vunpack.c.l.b16 %v2362
    %v2453 = vunpack.c.h.b16 %v2362
    %v2454 = vunpack.c.l.b16 %v2363
    %v2455 = vunpack.c.h.b16 %v2363
    %v2456 = vunpack.c.l.b16 %v2364
    %v2457 = vunpack.c.h.b16 %v2364
    %v2458 = vunpack.c.l.b16 %v2365
    %v2459 = vunpack.c.h.b16 %v2365
    %v2460 = vunpack.c.l.b16 %v2366
    %v2461 = vunpack.c.h.b16 %v2366
    %v2462 = vunpack.c.l.b16 %v2367
    %v2463 = vunpack.c.h.b16 %v2367
    %v2464 = vunpack.c.l.b16 %v2368
    %v2465 = vunpack.c.h.b16 %v2368
    %v2466 = vunpack.c.l.b16 %v2369
    %v2467 = vunpack.c.h.b16 %v2369
    %v2468 = vunpack.c.l.b16 %v2370
    %v2469 = vunpack.c.h.b16 %v2370
    %v2470 = vunpack.c.l.b16 %v2371
    %v2471 = vunpack.c.h.b16 %v2371
    %v2472 = vunpack.c.l.b16 %v2372
    %v2473 = vunpack.c.h.b16 %v2372
    %v2474 = vunpack.c.l.b16 %v2373
    %v2475 = vunpack.c.h.b16 %v2373
    %v2476 = vunpack.c.l.b16 %v2374
    %v2477 = vunpack.c.h.b16 %v2374
    %v2478 = vunpack.c.l.b16 %v2375
    %v2479 = vunpack.c.h.b16 %v2375
    %v2480 = vunpack.c.l.b16 %v2376
    %v2481 = vunpack.c.h.b16 %v2376
    %v2482 = vunpack.c.l.b16 %v2377
    %v2483 = vunpack.c.h.b16 %v2377
    %v2484 = vunpack.c.l.b16 %v2378
    %v2485 = vunpack.c.h.b16 %v2378
    %v2486 = vunpack.c.l.b16 %v2379
    %v2487 = vunpack.c.h.b16 %v2379
    %v2488 = vpack.c.b16 %v2426, %v2424
    %v2489 = vpack.c.b16 %v2427, %v2425
    %v2490 = vpack.c.b16 %v2430, %v2428
    %v2491 = vpack.c.b16 %v2431, %v2429
    %v2492 = vpack.c.b16 %v2434, %v2432
    %v2493 = vpack.c.b16 %v2435, %v2433
    %v2494 = vpack.c.b16 %v2438, %v2436
    %v2495 = vpack.c.b16 %v2439, %v2437
    %v2496 = vpack.c.b16 %v2442, %v2440
    %v2497 = vpack.c.b16 %v2443, %v2441
    %v2498 = vpack.c.b16 %v2446, %v2444
    %v2499 = vpack.c.b16 %v2447, %v2445
    %v2500 = vpack.c.b16 %v2450, %v2448
    %v2501 = vpack.c.b16 %v2451, %v2449
    %v2502 = vpack.c.b16 %v2454, %v2452
    %v2503 = vpack.c.b16 %v2455, %v2453
    %v2504 = vpack.c.b16 %v2458, %v2456
    %v2505 = vpack.c.b16 %v2459, %v2457
    %v2506 = vpack.c.b16 %v2462, %v2460
    %v2507 = vpack.c.b16 %v2463, %v2461
    %v2508 = vpack.c.b16 %v2466, %v2464
    %v2509 = vpack.c.b16 %v2467, %v2465
    %v2510 = vpack.c.b16 %v2470, %v2468
    %v2511 = vpack.c.b16 %v2471, %v2469
    %v2512 = vpack.c.b16 %v2474, %v2472
    %v2513 = vpack.c.b16 %v2475, %v2473
    %v2514 = vpack.c.b16 %v2478, %v2476
    %v2515 = vpack.c.b16 %v2479, %v2477
    %v2516 = vpack.c.b16 %v2482, %v2480
    %v2517 = vpack.c.b16 %v2483, %v2481
    %v2518 = vpack.c.b16 %v2486, %v2484
    %v2519 = vpack.c.b16 %v2487, %v2485
    %2552 = vmatprep.subr.bf16.mxu0 %v2503
    %2553 = vmatpush1.bf16.msra.mxu0 %v2502
    %2554 = vmatprep.subr.bf16.mxu0 %v2501
    %2555 = vmatpush1.bf16.msra.mxu0 %v2500
    %2556 = vmatprep.subr.bf16.mxu0 %v2499
    %2557 = vmatpush1.bf16.msra.mxu0 %v2498
    %2558 = vmatprep.subr.bf16.mxu0 %v2497
    %2559 = vmatpush1.bf16.msra.mxu0 %v2496
    %2560 = vmatprep.subr.bf16.mxu0 %v2495
    %2561 = vmatpush1.bf16.msra.mxu0 %v2494
    %2562 = vmatprep.subr.bf16.mxu0 %v2493
    %2563 = vmatpush1.bf16.msra.mxu0 %v2492
    %2564 = vmatprep.subr.bf16.mxu0 %v2491
    %2565 = vmatpush1.bf16.msra.mxu0 %v2490
    %2566 = vmatprep.subr.bf16.mxu0 %v2489
    %2567 = vmatpush1.bf16.msra.mxu0 %v2488
    %2568 = vmatprep.subr.bf16.mxu0 %v2519
    %2569 = vmatpush2.bf16.msra.mxu0 %v2518
    %2570 = vmatprep.subr.bf16.mxu0 %v2517
    %2571 = vmatpush2.bf16.msra.mxu0 %v2516
    %2572 = vmatprep.subr.bf16.mxu0 %v2515
    %2573 = vmatpush2.bf16.msra.mxu0 %v2514
    %2574 = vmatprep.subr.bf16.mxu0 %v2513
    %2575 = vmatpush2.bf16.msra.mxu0 %v2512
    %2576 = vmatprep.subr.bf16.mxu0 %v2511
    %2577 = vmatpush2.bf16.msra.mxu0 %v2510
    %2578 = vmatprep.subr.bf16.mxu0 %v2509
    %2579 = vmatpush2.bf16.msra.mxu0 %v2508
    %2580 = vmatprep.subr.bf16.mxu0 %v2507
    %2581 = vmatpush2.bf16.msra.mxu0 %v2506
    %2582 = vmatprep.subr.bf16.mxu0 %v2505
    %2583 = vmatpush2.bf16.msra.mxu0 %v2504
    %2584 = vmatprep.mubr.bf16.mxu0 %v2347
    %2585 = vmatmul.mubr.bf16.gmra.mxu0 %v2346
    %v2586 = vpop.f32.mrf.mxu0
    %v2587 = vadd.f32 %v2385, %v2586
    %v2588 = vpop.f32.mrf.mxu0
    %v2589 = vadd.f32 %v2389, %v2588
    %v2590 = vpop.f32.mrf.mxu0
    %v2591 = vpop.f32.mrf.mxu0
    %2592 = vdwg.mxu0
    %vm2593 = vcmask 1041408
    %v2594 = vsel %vm2593, %v2587, 0.0
    %v2595 = vsel %vm2593, %v2589, 0.0
    %v2596 = vadd.f32 %v2594, %v2595
    %2597 = vadd.xlane.f32.xlu0 %v2596
    %v2598 = vpop.xlane.xlu0 %2597
    %v2599 = vrcp.pop 256.0
    %v2600 = vmul.f32 %v2598, %v2599
    %v2601 = vsub.f32 %v2587, %v2600
    %v2602 = vsub.f32 %v2589, %v2600
    %v2603 = vmul.f32 %v2601, %v2601
    %v2604 = vmul.f32 %v2602, %v2602
    %v2605 = vsel %vm2593, %v2603, 0.0
    %v2606 = vsel %vm2593, %v2604, 0.0
    %v2607 = vadd.f32 %v2605, %v2606
    %2608 = vadd.xlane.f32.xlu0 %v2607
    %v2609 = vpop.xlane.xlu0 %2608
    %v2610 = vmul.f32 %v2609, %v2599
    %v2611 = vadd.f32 %v2610, 1e-05
    %v2612 = vrsqrt.pop %v2611
    %v2613 = vmul.f32 %v2601, %v2612
    %v2614 = vmul.f32 %v2602, %v2612
    %v2615 = vld [vmem:[#allocation9 + $0x13] sm:$0x3]
    %v2617 = vlaneseq
    %v2618 = vshrl.u32 %v2617, 7
    %v2619 = vsub.s32 0, %v2618
    %v2620 = vrot.slane %v2615, %v2619
    %v2621 = vlaneseq
    %v2622 = vshrl.u32 %v2621, 7
    %v2623 = vsub.s32 1, %v2622
    %v2624 = vrot.slane %v2615, %v2623
    %v2627 = vmul.f32 %v2613, %v2620
    %v2628 = vmul.f32 %v2614, %v2624
    %v2629 = vld [vmem:[#allocation9 + $0x15] sm:$0x3]
    %v2631 = vlaneseq
    %v2632 = vshrl.u32 %v2631, 7
    %v2633 = vsub.s32 0, %v2632
    %v2634 = vrot.slane %v2629, %v2633
    %v2635 = vlaneseq
    %v2636 = vshrl.u32 %v2635, 7
    %v2637 = vsub.s32 1, %v2636
    %v2638 = vrot.slane %v2629, %v2637
    %v2641 = vadd.f32 %v2627, %v2634
    %v2642 = vadd.f32 %v2628, %v2638
    %v2643 = vmax.f32 %v2641, 0.0
    %v2644 = vmax.f32 %v2642, 0.0
    %v2648 = vcombine.low %v2643, %v2644
    %v2649 = vcombine.low %v2339, %v2345
    %v2651 = vunpack.c.l.s4 1983009808
    %v2652 = vunpack.c.0.s8 %v2651
    %v2653 = vlaneseq
    %v2654 = vshrl.u32 %v2653, 7
    %v2655 = vsub.s32 %v2652, %v2654
    %v2656 = vrot.slane %v2648, %v2655
    %v2658 = vunpack.c.l.s4 1983009808
    %v2659 = vunpack.c.0.s8 %v2658
    %v2660 = vlaneseq
    %v2661 = vshrl.u32 %v2660, 7
    %v2662 = vsub.s32 %v2659, %v2661
    %v2663 = vrot.slane %v2649, %v2662
    %v2664 = vcombine.low %v2656, %v2663
    %2666 = vst [vmem:[%s14] sm:$0xff] %v2664
    // Predicated region
    $region78: #{optimized_visual_analyzer.1} parent=1 // pred_check
      _
    $region79: #{optimized_visual_analyzer.1} parent=1 // pred_check_branch
      %2668 = sbr.rel (0) target = $region81
    $region80: #{optimized_visual_analyzer.1} parent=1 // pred_region
      _
    $region81: #{optimized_visual_analyzer.1} parent=1 // pred_fallthru
      _
    // Predicated region
    $region82: #{optimized_visual_analyzer.1} parent=1 // pred_check
      _
    $region83: #{optimized_visual_analyzer.1} parent=1 // pred_check_branch
      %2670 = sbr.rel (0) target = $region85
    $region84: #{optimized_visual_analyzer.1} parent=1 // pred_region
      _
    $region85: #{optimized_visual_analyzer.1} parent=1 // pred_fallthru
      _
    %2671 = vsyncpa [#allocation3], 1
    %2672 = vsyncpa [#allocation5], 1
    %2673 = vsyncpa [#allocation8], 1

</llo_original>
